<compile_context>
chip_gen: v7x
topology: tpu7x:2x2x1
jax: 0.10.0
libtpu: 0.0.40
codegen_flags: <defaults>
</compile_context>

<pallas_src>
import functools

import jax
import jax.numpy as jnp
import numpy as np
from jax import lax
from jax.experimental import pallas as pl
from jax.experimental.pallas import tpu as pltpu

EPS = 1e-5  # PyTorch InstanceNorm2d default


def upblock_kernel(x_ref, w_ref, g_ref, b_ref, o_ref, tap_ref, *,
                   cin, k, wp, ho, wo, lv, inv_count):
    # x_ref   : (1, Cin, Lp)      upsampled+reflection-padded input, flattened
    # w_ref   : (K, Cout, K*Cin)  conv weight; w_ref[kh][:, kw*Cin + ci]
    # g_ref   : (Cout, 1)         instance-norm gamma (f32)
    # b_ref   : (Cout, 1)         instance-norm beta  (f32)
    # o_ref   : (1, Cout, Lv)     lane-dense output block (Lv multiple of 128)
    # tap_ref : (K*Cin, Lv)       VMEM scratch, rebuilt per kernel row kh

    # Conv as K accumulated MXU matmuls (reduction K*Cin each).  Regrouping
    # K*K -> K keeps the dominant VMEM scratch 3x smaller than full im2col
    # while still feeding the MXU a reasonably deep reduction.
    acc = None
    for kh in range(k):
        for kw in range(k):
            tap_ref[pl.ds(kw * cin, cin), :] = x_ref[0, :, pl.ds(kh * wp + kw, lv)]
        part = jnp.dot(w_ref[kh], tap_ref[...],
                       preferred_element_type=jnp.float32)
        acc = part if acc is None else acc + part

    # Validity mask built in-kernel (no HBM mask input).  Flattened position j
    # (row-major over the *padded* width Wp) is a real conv output iff
    # j // Wp < Ho and j % Wp < Wo.  row/col derived with an exact f32 trick
    # (values << 2^23) to avoid integer vector div/mod; 1/(Ho*Wo) folded in.
    jj = lax.broadcasted_iota(jnp.int32, (1, lv), 1).astype(jnp.float32)
    row = jnp.floor((jj + 0.5) * (1.0 / wp))
    col = jj - row * wp
    w_stat = jnp.where(jnp.logical_and(row < ho, col < wo), inv_count, 0.0)

    # InstanceNorm2d + affine folded into a per-channel FMA (single masked
    # pass for sum / sum-of-squares; garbage columns contribute exactly 0).
    am = acc * w_stat                                   # (Cout, Lv)
    mean = jnp.sum(am, axis=1, keepdims=True)           # (Cout, 1)
    ex2 = jnp.sum(am * acc, axis=1, keepdims=True)      # E[x^2]
    var = jnp.maximum(ex2 - mean * mean, 0.0)           # biased variance
    scale = g_ref[...] * lax.rsqrt(var + EPS)
    shift = b_ref[...] - mean * scale
    o_ref[0] = jnp.maximum(acc * scale + shift, 0.0).astype(o_ref.dtype)


def _round_up(x, m):
    return (x + m - 1) // m * m


def upblock_forward(x_nchw, w_oihw, bias, gamma, beta, *, kernel_size,
                    compute_dtype=None):
    """Forward pass matching the PyTorch UpBlock module (conv padding=0).

    `bias` is accepted for API parity but unused in the kernel: a per-channel
    constant added before InstanceNorm is exactly removed by the mean
    subtraction, so the output is unchanged.
    """
    del bias  # mathematically cancelled by InstanceNorm
    n, cin, h, w = x_nchw.shape
    cout = w_oihw.shape[0]
    k = kernel_size
    p = int(np.floor(k / 2))
    if compute_dtype is None:
        compute_dtype = x_nchw.dtype
    out_dtype = x_nchw.dtype

    hu, wu = 2 * h, 2 * w                   # upsampled size
    hp, wp = hu + 2 * p, wu + 2 * p         # reflection-padded size
    ho, wo = hp - k + 1, wp - k + 1         # conv output size (= 2h, 2w odd k)

    lv = _round_up(ho * wp, 128)            # lane-dense kernel output columns
    max_off = (k - 1) * wp + (k - 1)        # largest tap offset read in-kernel
    lp = _round_up(max_off + lv, 128)       # padded input slab length
    # Contract tying the garbage columns together: the in-kernel mask
    # (j//wp<ho & j%wp<wo), the Lv rounding, and the epilogue slice below must
    # all agree, otherwise wrapped-tap values would leak into real outputs.
    assert lv >= ho * wp and lp >= max_off + lv

    # ---- prologue: upsample(x2 nearest) + ReflectionPad2d(p) + flatten +
    #      lane-pad fused into a SINGLE gather via a precomputed index map ----
    def _reflect(idx, size):
        idx = np.where(idx < 0, -idx, idx)
        return np.where(idx >= size, 2 * (size - 1) - idx, idx)

    row_src = _reflect(np.arange(hp) - p, hu) // 2      # padded row -> src row
    col_src = _reflect(np.arange(wp) - p, wu) // 2      # padded col -> src col
    flat = (row_src[:, None] * w + col_src[None, :]).reshape(-1)
    flat = np.concatenate([flat, np.zeros(lp - hp * wp, dtype=flat.dtype)])
    flat_idx = jnp.asarray(flat.astype(np.int32))       # (Lp,), tail is dummy

    x_src = x_nchw.reshape(n, cin, h * w).astype(compute_dtype)
    x_flat = jnp.take(x_src, flat_idx, axis=2)          # (N, Cin, Lp)

    # Weights (Cout, Cin, K, K) -> (K, Cout, K*Cin); per-kh column order is
    # (kw, cin), matching the tap rows built inside the kernel.
    w2 = jnp.transpose(w_oihw, (2, 0, 3, 1)).reshape(k, cout, k * cin)
    w2 = w2.astype(compute_dtype)

    g2 = gamma.astype(jnp.float32).reshape(cout, 1)
    b2 = beta.astype(jnp.float32).reshape(cout, 1)

    # Explicit VMEM budget: double-buffered input slab + output block + params,
    # tap scratch, and ~4 live (Cout, Lv) f32 values; 2x headroom, capped at
    # v7x physical VMEM.
    cbytes = jnp.dtype(compute_dtype).itemsize
    obytes = jnp.dtype(out_dtype).itemsize
    need = (2 * cin * lp * cbytes + 2 * cout * lv * obytes
            + k * cin * lv * cbytes + 4 * cout * lv * 4
            + 2 * k * cout * k * cin * cbytes + 4 * cout * 4)
    vmem_limit = int(min(max(2 * need, 32 * 1024 * 1024), 64 * 1024 * 1024))

    out = pl.pallas_call(
        functools.partial(upblock_kernel, cin=cin, k=k, wp=wp, ho=ho, wo=wo,
                          lv=lv, inv_count=1.0 / float(ho * wo)),
        out_shape=jax.ShapeDtypeStruct((n, cout, lv), out_dtype),
        grid=(n,),
        in_specs=[
            pl.BlockSpec((1, cin, lp), lambda b: (b, 0, 0)),        # input slab
            pl.BlockSpec((k, cout, k * cin), lambda b: (0, 0, 0)),  # weights
            pl.BlockSpec((cout, 1), lambda b: (0, 0)),              # gamma
            pl.BlockSpec((cout, 1), lambda b: (0, 0)),              # beta
        ],
        out_specs=pl.BlockSpec((1, cout, lv), lambda b: (b, 0, 0)),
        scratch_shapes=[pltpu.VMEM((k * cin, lv), compute_dtype)],
        compiler_params=pltpu.CompilerParams(
            dimension_semantics=("parallel",),
            vmem_limit_bytes=vmem_limit),
    )(x_flat, w2, g2, b2)

    # Epilogue: drop padded-width garbage columns, reshape straight to NCHW.
    y = out[:, :, : ho * wp].reshape(n, cout, ho, wp)[:, :, :, :wo]
    return y


def upblock_reference(x, w, bias, gamma, beta, *, kernel_size):
    """Pure-JAX reference mirroring the PyTorch module."""
    k = kernel_size
    p = int(np.floor(k / 2))
    xu = jnp.repeat(jnp.repeat(x, 2, axis=2), 2, axis=3)
    xp = jnp.pad(xu, ((0, 0), (0, 0), (p, p), (p, p)), mode="reflect")
    y = lax.conv_general_dilated(
        xp, w, window_strides=(1, 1), padding="VALID",
        dimension_numbers=("NCHW", "OIHW", "NCHW"),
        precision=lax.Precision.HIGHEST)
    y = y + bias[None, :, None, None]
    mean = jnp.mean(y, axis=(2, 3), keepdims=True)
    var = jnp.mean((y - mean) ** 2, axis=(2, 3), keepdims=True)
    yn = (y - mean) * lax.rsqrt(var + EPS)
    yn = yn * gamma[None, :, None, None] + beta[None, :, None, None]
    return jnp.maximum(yn, 0.0)


if __name__ == "__main__":
    N, Cin, Cout, H, W, K = 2, 4, 8, 16, 16, 3

    key = jax.random.PRNGKey(0)
    kx, kw_, kb = jax.random.split(key, 3)
    x = jax.random.normal(kx, (N, Cin, H, W), dtype=jnp.float32)

    # Deterministic parameter init (shapes from nn.Conv2d / nn.InstanceNorm2d).
    fan_in = Cin * K * K
    bound = 1.0 / np.sqrt(fan_in)
    w = jax.random.uniform(kw_, (Cout, Cin, K, K), jnp.float32, -bound, bound)
    b = jax.random.uniform(kb, (Cout,), jnp.float32, -bound, bound)
    gamma = jnp.ones((Cout,), jnp.float32)   # InstanceNorm2d affine weight init
    beta = jnp.zeros((Cout,), jnp.float32)   # InstanceNorm2d affine bias init

    # --- float32 run: strict check against the pure-JAX reference ---
    out = jax.block_until_ready(
        upblock_forward(x, w, b, gamma, beta, kernel_size=K))
    ref = jax.block_until_ready(
        upblock_reference(x, w, b, gamma, beta, kernel_size=K))
    assert out.shape == (N, Cout, 2 * H, 2 * W), out.shape
    np.testing.assert_allclose(np.asarray(out), np.asarray(ref),
                               atol=2e-4, rtol=2e-4)

    # --- bfloat16 matmul-operand run (half HBM read BW; f32 accumulation) ---
    out_bf16 = jax.block_until_ready(
        upblock_forward(x, w, b, gamma, beta, kernel_size=K,
                        compute_dtype=jnp.bfloat16))
    x_r = x.astype(jnp.bfloat16).astype(jnp.float32)
    w_r = w.astype(jnp.bfloat16).astype(jnp.float32)
    ref_bf16 = jax.block_until_ready(
        upblock_reference(x_r, w_r, b, gamma, beta, kernel_size=K))
    np.testing.assert_allclose(np.asarray(out_bf16), np.asarray(ref_bf16),
                               atol=2e-3, rtol=2e-3)

    print("KERNEL_OK")
</pallas_src>

<mosaic_0001>
module attributes {stable_mosaic.version = 11 : i64} {
  func.func @upblock_kernel(%arg0: i32, %arg1: memref<1x4x1280xf32, #tpu.memory_space<vmem>>, %arg2: memref<3x8x12xf32, #tpu.memory_space<vmem>>, %arg3: memref<8x1xf32, #tpu.memory_space<vmem>>, %arg4: memref<8x1xf32, #tpu.memory_space<vmem>>, %arg5: memref<1x8x1152xf32, #tpu.memory_space<vmem>>, %arg6: memref<12x1152xf32, #tpu.memory_space<vmem>>) attributes {dimension_semantics = [#tpu.dimension_semantics<parallel>], iteration_bounds = array<i64: 2>, scalar_prefetch = 0 : i64, scratch_operands = 1 : i64, tpu.core_type = #tpu.core_type<tc>, window_params = [{transform_indices = @transform_0, window_bounds = array<i64: 1, 4, 1280>}, {pipeline_mode = #tpu.pipeline_mode<synchronous>, transform_indices = @transform_1, window_bounds = array<i64: 3, 8, 12>}, {pipeline_mode = #tpu.pipeline_mode<synchronous>, transform_indices = @transform_2, window_bounds = array<i64: 8, 1>}, {pipeline_mode = #tpu.pipeline_mode<synchronous>, transform_indices = @transform_3, window_bounds = array<i64: 8, 1>}, {transform_indices = @transform_4, window_bounds = array<i64: 1, 8, 1152>}]} {
    %c0 = arith.constant 0 : index
    %c0_0 = arith.constant 0 : index
    %c0_1 = arith.constant 0 : index
    %0 = vector.load %arg1[%c0, %c0_0, %c0_1] : memref<1x4x1280xf32, #tpu.memory_space<vmem>>, vector<1x4x1152xf32>
    %1 = vector.shape_cast %0 : vector<1x4x1152xf32> to vector<4x1152xf32>
    %c0_2 = arith.constant 0 : index
    %c0_3 = arith.constant 0 : index
    %2 = vector.load %arg6[%c0_2, %c0_3] : memref<12x1152xf32, #tpu.memory_space<vmem>>, vector<4x1152xf32>
    tpu.vector_store %arg6[%c0_2, %c0_3], %1 {strides = array<i32>} : memref<12x1152xf32, #tpu.memory_space<vmem>>, vector<4x1152xf32>,
    %c0_4 = arith.constant 0 : index
    %c0_5 = arith.constant 0 : index
    %c1 = arith.constant 1 : index
    %3 = vector.load %arg1[%c0_4, %c0_5, %c1] : memref<1x4x1280xf32, #tpu.memory_space<vmem>>, vector<1x4x1152xf32>
    %4 = vector.shape_cast %3 : vector<1x4x1152xf32> to vector<4x1152xf32>
    %c4 = arith.constant 4 : index
    %c0_6 = arith.constant 0 : index
    %5 = vector.load %arg6[%c4, %c0_6] : memref<12x1152xf32, #tpu.memory_space<vmem>>, vector<4x1152xf32>
    tpu.vector_store %arg6[%c4, %c0_6], %4 {strides = array<i32>} : memref<12x1152xf32, #tpu.memory_space<vmem>>, vector<4x1152xf32>,
    %c0_7 = arith.constant 0 : index
    %c0_8 = arith.constant 0 : index
    %c2 = arith.constant 2 : index
    %6 = vector.load %arg1[%c0_7, %c0_8, %c2] : memref<1x4x1280xf32, #tpu.memory_space<vmem>>, vector<1x4x1152xf32>
    %7 = vector.shape_cast %6 : vector<1x4x1152xf32> to vector<4x1152xf32>
    %c8 = arith.constant 8 : index
    %c0_9 = arith.constant 0 : index
    %8 = vector.load %arg6[%c8, %c0_9] : memref<12x1152xf32, #tpu.memory_space<vmem>>, vector<4x1152xf32>
    tpu.vector_store %arg6[%c8, %c0_9], %7 {strides = array<i32>} : memref<12x1152xf32, #tpu.memory_space<vmem>>, vector<4x1152xf32>,
    %c0_10 = arith.constant 0 : index
    %c0_11 = arith.constant 0 : index
    %c0_12 = arith.constant 0 : index
    %9 = vector.load %arg2[%c0_10, %c0_11, %c0_12] : memref<3x8x12xf32, #tpu.memory_space<vmem>>, vector<1x8x12xf32>
    %10 = vector.shape_cast %9 : vector<1x8x12xf32> to vector<8x12xf32>
    %c0_13 = arith.constant 0 : index
    %c0_14 = arith.constant 0 : index
    %11 = vector.load %arg6[%c0_13, %c0_14] : memref<12x1152xf32, #tpu.memory_space<vmem>>, vector<12x1152xf32>
    %cst = arith.constant dense<0.000000e+00> : vector<8x1152xf32>
    %12 = tpu.matmul %10, %11, %cst {dimension_numbers = #tpu.dot_dimension_numbers<[1], [0], [0], [1], [0, 0, 1, 1], [], []>} : vector<8x12xf32>, vector<12x1152xf32>, vector<8x1152xf32> -> vector<8x1152xf32>
    %c0_15 = arith.constant 0 : index
    %c0_16 = arith.constant 0 : index
    %c34 = arith.constant 34 : index
    %13 = vector.load %arg1[%c0_15, %c0_16, %c34] : memref<1x4x1280xf32, #tpu.memory_space<vmem>>, vector<1x4x1152xf32>
    %14 = vector.shape_cast %13 : vector<1x4x1152xf32> to vector<4x1152xf32>
    %c0_17 = arith.constant 0 : index
    %c0_18 = arith.constant 0 : index
    %15 = vector.load %arg6[%c0_17, %c0_18] : memref<12x1152xf32, #tpu.memory_space<vmem>>, vector<4x1152xf32>
    tpu.vector_store %arg6[%c0_17, %c0_18], %14 {strides = array<i32>} : memref<12x1152xf32, #tpu.memory_space<vmem>>, vector<4x1152xf32>,
    %c0_19 = arith.constant 0 : index
    %c0_20 = arith.constant 0 : index
    %c35 = arith.constant 35 : index
    %16 = vector.load %arg1[%c0_19, %c0_20, %c35] : memref<1x4x1280xf32, #tpu.memory_space<vmem>>, vector<1x4x1152xf32>
    %17 = vector.shape_cast %16 : vector<1x4x1152xf32> to vector<4x1152xf32>
    %c4_21 = arith.constant 4 : index
    %c0_22 = arith.constant 0 : index
    %18 = vector.load %arg6[%c4_21, %c0_22] : memref<12x1152xf32, #tpu.memory_space<vmem>>, vector<4x1152xf32>
    tpu.vector_store %arg6[%c4_21, %c0_22], %17 {strides = array<i32>} : memref<12x1152xf32, #tpu.memory_space<vmem>>, vector<4x1152xf32>,
    %c0_23 = arith.constant 0 : index
    %c0_24 = arith.constant 0 : index
    %c36 = arith.constant 36 : index
    %19 = vector.load %arg1[%c0_23, %c0_24, %c36] : memref<1x4x1280xf32, #tpu.memory_space<vmem>>, vector<1x4x1152xf32>
    %20 = vector.shape_cast %19 : vector<1x4x1152xf32> to vector<4x1152xf32>
    %c8_25 = arith.constant 8 : index
    %c0_26 = arith.constant 0 : index
    %21 = vector.load %arg6[%c8_25, %c0_26] : memref<12x1152xf32, #tpu.memory_space<vmem>>, vector<4x1152xf32>
    tpu.vector_store %arg6[%c8_25, %c0_26], %20 {strides = array<i32>} : memref<12x1152xf32, #tpu.memory_space<vmem>>, vector<4x1152xf32>,
    %c1_27 = arith.constant 1 : index
    %c0_28 = arith.constant 0 : index
    %c0_29 = arith.constant 0 : index
    %22 = vector.load %arg2[%c1_27, %c0_28, %c0_29] : memref<3x8x12xf32, #tpu.memory_space<vmem>>, vector<1x8x12xf32>
    %23 = vector.shape_cast %22 : vector<1x8x12xf32> to vector<8x12xf32>
    %c0_30 = arith.constant 0 : index
    %c0_31 = arith.constant 0 : index
    %24 = vector.load %arg6[%c0_30, %c0_31] : memref<12x1152xf32, #tpu.memory_space<vmem>>, vector<12x1152xf32>
    %cst_32 = arith.constant dense<0.000000e+00> : vector<8x1152xf32>
    %25 = tpu.matmul %23, %24, %cst_32 {dimension_numbers = #tpu.dot_dimension_numbers<[1], [0], [0], [1], [0, 0, 1, 1], [], []>} : vector<8x12xf32>, vector<12x1152xf32>, vector<8x1152xf32> -> vector<8x1152xf32>
    %26 = arith.addf %12, %25 : vector<8x1152xf32>
    %c0_33 = arith.constant 0 : index
    %c0_34 = arith.constant 0 : index
    %c68 = arith.constant 68 : index
    %27 = vector.load %arg1[%c0_33, %c0_34, %c68] : memref<1x4x1280xf32, #tpu.memory_space<vmem>>, vector<1x4x1152xf32>
    %28 = vector.shape_cast %27 : vector<1x4x1152xf32> to vector<4x1152xf32>
    %c0_35 = arith.constant 0 : index
    %c0_36 = arith.constant 0 : index
    %29 = vector.load %arg6[%c0_35, %c0_36] : memref<12x1152xf32, #tpu.memory_space<vmem>>, vector<4x1152xf32>
    tpu.vector_store %arg6[%c0_35, %c0_36], %28 {strides = array<i32>} : memref<12x1152xf32, #tpu.memory_space<vmem>>, vector<4x1152xf32>,
    %c0_37 = arith.constant 0 : index
    %c0_38 = arith.constant 0 : index
    %c69 = arith.constant 69 : index
    %30 = vector.load %arg1[%c0_37, %c0_38, %c69] : memref<1x4x1280xf32, #tpu.memory_space<vmem>>, vector<1x4x1152xf32>
    %31 = vector.shape_cast %30 : vector<1x4x1152xf32> to vector<4x1152xf32>
    %c4_39 = arith.constant 4 : index
    %c0_40 = arith.constant 0 : index
    %32 = vector.load %arg6[%c4_39, %c0_40] : memref<12x1152xf32, #tpu.memory_space<vmem>>, vector<4x1152xf32>
    tpu.vector_store %arg6[%c4_39, %c0_40], %31 {strides = array<i32>} : memref<12x1152xf32, #tpu.memory_space<vmem>>, vector<4x1152xf32>,
    %c0_41 = arith.constant 0 : index
    %c0_42 = arith.constant 0 : index
    %c70 = arith.constant 70 : index
    %33 = vector.load %arg1[%c0_41, %c0_42, %c70] : memref<1x4x1280xf32, #tpu.memory_space<vmem>>, vector<1x4x1152xf32>
    %34 = vector.shape_cast %33 : vector<1x4x1152xf32> to vector<4x1152xf32>
    %c8_43 = arith.constant 8 : index
    %c0_44 = arith.constant 0 : index
    %35 = vector.load %arg6[%c8_43, %c0_44] : memref<12x1152xf32, #tpu.memory_space<vmem>>, vector<4x1152xf32>
    tpu.vector_store %arg6[%c8_43, %c0_44], %34 {strides = array<i32>} : memref<12x1152xf32, #tpu.memory_space<vmem>>, vector<4x1152xf32>,
    %c2_45 = arith.constant 2 : index
    %c0_46 = arith.constant 0 : index
    %c0_47 = arith.constant 0 : index
    %36 = vector.load %arg2[%c2_45, %c0_46, %c0_47] : memref<3x8x12xf32, #tpu.memory_space<vmem>>, vector<1x8x12xf32>
    %37 = vector.shape_cast %36 : vector<1x8x12xf32> to vector<8x12xf32>
    %c0_48 = arith.constant 0 : index
    %c0_49 = arith.constant 0 : index
    %38 = vector.load %arg6[%c0_48, %c0_49] : memref<12x1152xf32, #tpu.memory_space<vmem>>, vector<12x1152xf32>
    %cst_50 = arith.constant dense<0.000000e+00> : vector<8x1152xf32>
    %39 = tpu.matmul %37, %38, %cst_50 {dimension_numbers = #tpu.dot_dimension_numbers<[1], [0], [0], [1], [0, 0, 1, 1], [], []>} : vector<8x12xf32>, vector<12x1152xf32>, vector<8x1152xf32> -> vector<8x1152xf32>
    %40 = arith.addf %26, %39 : vector<8x1152xf32>
    %41 = tpu.iota {dimensions = array<i32: 1>} : vector<1x1152xi32>
    %42 = arith.sitofp %41 : vector<1x1152xi32> to vector<1x1152xf32>
    %cst_51 = arith.constant 5.000000e-01 : f32
    %43 = vector.broadcast %cst_51 : f32 to vector<1x1152xf32>
    %44 = arith.addf %42, %43 : vector<1x1152xf32>
    %cst_52 = arith.constant 0.0294117648 : f32
    %45 = vector.broadcast %cst_52 : f32 to vector<1x1152xf32>
    %46 = arith.mulf %44, %45 : vector<1x1152xf32>
    %47 = math.floor %46 : vector<1x1152xf32>
    %cst_53 = arith.constant 3.400000e+01 : f32
    %48 = vector.broadcast %cst_53 : f32 to vector<1x1152xf32>
    %49 = arith.mulf %47, %48 : vector<1x1152xf32>
    %50 = arith.subf %42, %49 : vector<1x1152xf32>
    %cst_54 = arith.constant 3.200000e+01 : f32
    %51 = vector.broadcast %cst_54 : f32 to vector<1x1152xf32>
    %52 = arith.cmpf olt, %47, %51 : vector<1x1152xf32>
    %cst_55 = arith.constant 3.200000e+01 : f32
    %53 = vector.broadcast %cst_55 : f32 to vector<1x1152xf32>
    %54 = arith.cmpf olt, %50, %53 : vector<1x1152xf32>
    %55 = arith.andi %52, %54 : vector<1x1152xi1>
    %cst_56 = arith.constant 9.765625E-4 : f32
    %cst_57 = arith.constant 0.000000e+00 : f32
    %56 = vector.broadcast %cst_56 : f32 to vector<1x1152xf32>
    %57 = vector.broadcast %cst_57 : f32 to vector<1x1152xf32>
    %58 = arith.select %55, %56, %57 : vector<1x1152xi1>, vector<1x1152xf32>
    %59 = vector.broadcast %58 : vector<1x1152xf32> to vector<8x1152xf32>
    %60 = arith.mulf %40, %59 : vector<8x1152xf32>
    %cst_58 = arith.constant dense<0.000000e+00> : vector<8xf32>
    %61 = vector.multi_reduction <add>, %60, %cst_58 [1] : vector<8x1152xf32> to vector<8xf32>
    %62 = vector.shape_cast %61 : vector<8xf32> to vector<8x1xf32>
    %63 = arith.mulf %60, %40 : vector<8x1152xf32>
    %cst_59 = arith.constant dense<0.000000e+00> : vector<8xf32>
    %64 = vector.multi_reduction <add>, %63, %cst_59 [1] : vector<8x1152xf32> to vector<8xf32>
    %65 = vector.shape_cast %64 : vector<8xf32> to vector<8x1xf32>
    %66 = arith.mulf %62, %62 : vector<8x1xf32>
    %67 = arith.subf %65, %66 : vector<8x1xf32>
    %cst_60 = arith.constant 0.000000e+00 : f32
    %68 = vector.broadcast %cst_60 : f32 to vector<8x1xf32>
    %69 = arith.maximumf %67, %68 : vector<8x1xf32>
    %c0_61 = arith.constant 0 : index
    %c0_62 = arith.constant 0 : index
    %70 = vector.load %arg3[%c0_61, %c0_62] : memref<8x1xf32, #tpu.memory_space<vmem>>, vector<8x1xf32>
    %cst_63 = arith.constant 9.99999974E-6 : f32
    %71 = vector.broadcast %cst_63 : f32 to vector<8x1xf32>
    %72 = arith.addf %69, %71 : vector<8x1xf32>
    %73 = math.rsqrt %72 : vector<8x1xf32>
    %74 = arith.mulf %70, %73 : vector<8x1xf32>
    %c0_64 = arith.constant 0 : index
    %c0_65 = arith.constant 0 : index
    %75 = vector.load %arg4[%c0_64, %c0_65] : memref<8x1xf32, #tpu.memory_space<vmem>>, vector<8x1xf32>
    %76 = arith.mulf %62, %74 : vector<8x1xf32>
    %77 = arith.subf %75, %76 : vector<8x1xf32>
    %78 = vector.broadcast %74 : vector<8x1xf32> to vector<8x1152xf32>
    %79 = arith.mulf %40, %78 : vector<8x1152xf32>
    %80 = vector.broadcast %77 : vector<8x1xf32> to vector<8x1152xf32>
    %81 = arith.addf %79, %80 : vector<8x1152xf32>
    %cst_66 = arith.constant 0.000000e+00 : f32
    %82 = vector.broadcast %cst_66 : f32 to vector<8x1152xf32>
    %83 = arith.maximumf %81, %82 : vector<8x1152xf32>
    %c0_67 = arith.constant 0 : index
    %c0_68 = arith.constant 0 : index
    %c0_69 = arith.constant 0 : index
    %84 = vector.load %arg5[%c0_67, %c0_68, %c0_69] : memref<1x8x1152xf32, #tpu.memory_space<vmem>>, vector<1x8x1152xf32>
    %85 = vector.shape_cast %84 : vector<1x8x1152xf32> to vector<8x1152xf32>
    %86 = vector.shape_cast %83 : vector<8x1152xf32> to vector<1x8x1152xf32>
    tpu.vector_store %arg5[%c0_67, %c0_68, %c0_69], %86 {strides = array<i32>} : memref<1x8x1152xf32, #tpu.memory_space<vmem>>, vector<1x8x1152xf32>,
    return
  }
  func.func @transform_0(%arg0: i32) -> (i32, i32, i32) {
    %c0_i32 = arith.constant 0 : i32
    %c0_i32_0 = arith.constant 0 : i32
    %c0_i32_1 = arith.constant 0 : i32
    return %arg0, %c0_i32, %c0_i32_0 : i32, i32, i32
  }
  func.func @transform_1(%arg0: i32) -> (i32, i32, i32) {
    %c0_i32 = arith.constant 0 : i32
    %c0_i32_0 = arith.constant 0 : i32
    %c0_i32_1 = arith.constant 0 : i32
    %c0_i32_2 = arith.constant 0 : i32
    return %c0_i32, %c0_i32_0, %c0_i32_1 : i32, i32, i32
  }
  func.func @transform_2(%arg0: i32) -> (i32, i32) {
    %c0_i32 = arith.constant 0 : i32
    %c0_i32_0 = arith.constant 0 : i32
    %c0_i32_1 = arith.constant 0 : i32
    return %c0_i32, %c0_i32_0 : i32, i32
  }
  func.func @transform_3(%arg0: i32) -> (i32, i32) {
    %c0_i32 = arith.constant 0 : i32
    %c0_i32_0 = arith.constant 0 : i32
    %c0_i32_1 = arith.constant 0 : i32
    return %c0_i32, %c0_i32_0 : i32, i32
  }
  func.func @transform_4(%arg0: i32) -> (i32, i32, i32) {
    %c0_i32 = arith.constant 0 : i32
    %c0_i32_0 = arith.constant 0 : i32
    %c0_i32_1 = arith.constant 0 : i32
    return %arg0, %c0_i32, %c0_i32_0 : i32, i32, i32
  }
}

</mosaic_0001>

<llo_original>
// kernel: tpu_custom_call.1
$region0: #{tpu_custom_call.1}
  #allocation0 [shape = 'u32[]', space=smem, size = 0x4, offset = 0x4, fixed_abs, tag = 'smem constant byte address 0x4 - core index']
  #allocation1 [shape = 'u32[144,128]{1,0:T(1,128)}', space=vmem, size = 0x12000, scoped, tag = 'internal scratch']
  #allocation2 [shape = 'f32[12,1152]{1,0:T(8,128)}', space=vmem, size = 0x12000, scoped, tag = 'scratch operand']
  %s0 = inlined_call_operand.hbm [shape: f32[2,4,1280], index: 0, kind: input, shape index: {}]
  %s1 = inlined_call_operand.hbm [shape: f32[3,8,12], index: 1, kind: input, shape index: {}]
  %s2 = inlined_call_operand.vmem [shape: f32[8,1], index: 2, kind: input, shape index: {}]
  %s3 = inlined_call_operand.vmem [shape: f32[8,1], index: 3, kind: input, shape index: {}]
  %s4 = inlined_call_operand.hbm [shape: f32[2,8,1152], index: 4, kind: output, shape index: {}]
  %s5 = sld [smem:[#allocation0]]
  $region57: #{tpu_custom_call.1} parent=0
    _
  %s7 = ssub.s32 1, %s5
  %s8 = scalar_select 0, %s7, %s5
  $region1: #{tpu_custom_call.1} parent=0
    #allocation3 [shape = 'u8[40960]{0}', space=vmem, size = 0xa000, scoped, tag = 'input window, operand 0']
    #allocation4 [shape = 's32[2]{0}', space=sflag, size = 0x8, scoped, tag = 'scoped memory for tpu_custom_call.1']
    #allocation5 [shape = 's32[2]{0}', space=sflag, size = 0x8, scoped, tag = 'scoped memory for tpu_custom_call.1']
    #allocation6 [shape = 'u8[12288]{0}', space=vmem, size = 0x3000, scoped, tag = 'input window, operand 1, single buffered']
    #allocation7 [shape = 's32[1]{0}', space=sflag, size = 0x4, scoped, tag = 'scoped memory for tpu_custom_call.1']
    #allocation8 [shape = 'u8[73728]{0}', space=vmem, size = 0x12000, scoped, tag = 'output window, operand 0']
    %9 = vsyncpa [#allocation4], 0
    %s10 = scalar_lea.sflag [#allocation4], 1
    %11 = vsyncpa %s10, 0
    %12 = vsyncpa [#allocation7], 0
    %13 = vsyncpa [#allocation5], 0
    %s14 = scalar_lea.sflag [#allocation5], 1
    %15 = vsyncpa %s14, 0
    loop: start=0, step=1, limit=4
    $region2: #{tpu_custom_call.1} parent=1 // loop_pre_header
      _
    $region3: #{tpu_custom_call.1} parent=1 // loop_header
      %s17 = sphi 0, %s21
      %p18 = scmp.ge.s32.totalorder %s17, 4
      %s27 = sphi 0, %s29
      %s30 = sphi 0, %s27
      %s31 = sphi 0, %s30
      %s47 = sphi 0, %s31
      %s51 = sphi 0, %s51
      %s53 = sphi 0, %s51
      %s54 = sphi 0, %s53
      %s68 = sphi 0, %s54
      %s72 = sphi 0, %s72
      %s74 = sphi 0, %s72
      %s75 = sphi 0, %s74
      %s89 = sphi 0, %s75
      %s93 = sphi 0, %s93
      %s95 = sphi 0, %s93
      %s96 = sphi 0, %s95
      %s110 = sphi 0, %s96
      %s116 = sphi 0, %s118
      %s119 = sphi 0, %s116
      %s120 = sphi 0, %s119
      %s136 = sphi 0, %s120
    $region4: #{tpu_custom_call.1} parent=1 // loop_header_branch
      %20 = sbr.rel (%p18) target = $region8
    $region5: #{tpu_custom_call.1} parent=1 // loop_body
      %s22 = ssub.s32 %s17, 1
      %s23 = ssub.s32 %s17, 2
      %s24 = sadd.s32 %s17, 1
      %s25 = ssub.s32 %s17, %s24
      %p26 = scmp.eq.s32.totalorder %s25, 0
      %s28 = sadd.s32 %s27, 1
      %s29 = scalar_select %p26, %s27, %s28
      %p32 = pneg %p26
      %p33 = scmp.eq.s32.totalorder %s17, 1
      %p34 = por %p32, %p33
      %p35 = scmp.ne.s32.totalorder %s27, %s30
      %p36 = scmp.eq.s32.totalorder %s17, 0
      %p37 = por %p35, %p36
      %p38 = scmp.ne.s32.totalorder %s27, %s30
      %p39 = scmp.eq.s32.totalorder %s22, 1
      %p40 = por %p38, %p39
      %p41 = scmp.ne.s32.totalorder %s30, %s31
      %p42 = scmp.eq.s32.totalorder %s22, 0
      %p43 = por %p41, %p42
      %p44 = scmp.ne.s32.totalorder %s30, %s31
      %p45 = scmp.eq.s32.totalorder %s23, 1
      %p46 = por %p44, %p45
      %p48 = scmp.ne.s32.totalorder %s31, %s47
      %p49 = scmp.eq.s32.totalorder %s23, 0
      %p50 = por %p48, %p49
      %s52 = sadd.s32 %s51, 1
      %p55 = scmp.eq.s32.totalorder %s17, 1
      %p56 = scmp.ne.s32.totalorder %s51, %s53
      %p57 = scmp.eq.s32.totalorder %s17, 0
      %p58 = por %p56, %p57
      %p59 = scmp.ne.s32.totalorder %s51, %s53
      %p60 = scmp.eq.s32.totalorder %s22, 1
      %p61 = por %p59, %p60
      %p62 = scmp.ne.s32.totalorder %s53, %s54
      %p63 = scmp.eq.s32.totalorder %s22, 0
      %p64 = por %p62, %p63
      %p65 = scmp.ne.s32.totalorder %s53, %s54
      %p66 = scmp.eq.s32.totalorder %s23, 1
      %p67 = por %p65, %p66
      %p69 = scmp.ne.s32.totalorder %s54, %s68
      %p70 = scmp.eq.s32.totalorder %s23, 0
      %p71 = por %p69, %p70
      %s73 = sadd.s32 %s72, 1
      %p76 = scmp.eq.s32.totalorder %s17, 1
      %p77 = scmp.ne.s32.totalorder %s72, %s74
      %p78 = scmp.eq.s32.totalorder %s17, 0
      %p79 = por %p77, %p78
      %p80 = scmp.ne.s32.totalorder %s72, %s74
      %p81 = scmp.eq.s32.totalorder %s22, 1
      %p82 = por %p80, %p81
      %p83 = scmp.ne.s32.totalorder %s74, %s75
      %p84 = scmp.eq.s32.totalorder %s22, 0
      %p85 = por %p83, %p84
      %p86 = scmp.ne.s32.totalorder %s74, %s75
      %p87 = scmp.eq.s32.totalorder %s23, 1
      %p88 = por %p86, %p87
      %p90 = scmp.ne.s32.totalorder %s75, %s89
      %p91 = scmp.eq.s32.totalorder %s23, 0
      %p92 = por %p90, %p91
      %s94 = sadd.s32 %s93, 1
      %p97 = scmp.eq.s32.totalorder %s17, 1
      %p98 = scmp.ne.s32.totalorder %s93, %s95
      %p99 = scmp.eq.s32.totalorder %s17, 0
      %p100 = por %p98, %p99
      %p101 = scmp.ne.s32.totalorder %s93, %s95
      %p102 = scmp.eq.s32.totalorder %s22, 1
      %p103 = por %p101, %p102
      %p104 = scmp.ne.s32.totalorder %s95, %s96
      %p105 = scmp.eq.s32.totalorder %s22, 0
      %p106 = por %p104, %p105
      %p107 = scmp.ne.s32.totalorder %s95, %s96
      %p108 = scmp.eq.s32.totalorder %s23, 1
      %p109 = por %p107, %p108
      %p111 = scmp.ne.s32.totalorder %s96, %s110
      %p112 = scmp.eq.s32.totalorder %s23, 0
      %p113 = por %p111, %p112
      %s114 = ssub.s32 %s17, %s24
      %p115 = scmp.eq.s32.totalorder %s114, 0
      %s117 = sadd.s32 %s116, 1
      %s118 = scalar_select %p115, %s116, %s117
      %p121 = pneg %p115
      %p122 = scmp.eq.s32.totalorder %s17, 1
      %p123 = por %p121, %p122
      %p124 = scmp.ne.s32.totalorder %s116, %s119
      %p125 = scmp.eq.s32.totalorder %s17, 0
      %p126 = por %p124, %p125
      %p127 = scmp.ne.s32.totalorder %s116, %s119
      %p128 = scmp.eq.s32.totalorder %s22, 1
      %p129 = por %p127, %p128
      %p130 = scmp.ne.s32.totalorder %s119, %s120
      %p131 = scmp.eq.s32.totalorder %s22, 0
      %p132 = por %p130, %p131
      %p133 = scmp.ne.s32.totalorder %s119, %s120
      %p134 = scmp.eq.s32.totalorder %s23, 1
      %p135 = por %p133, %p134
      %p137 = scmp.ne.s32.totalorder %s120, %s136
      %p138 = scmp.eq.s32.totalorder %s23, 0
      %p139 = por %p137, %p138
      %p140 = scmp.le.s32.totalorder 1, %s17
      %p141 = scmp.lt.s32.totalorder %s17, 3
      %p142 = pnand %p140, %p141
      %p143 = pneg %p142
      // Predicated region
      $region9: #{tpu_custom_call.1} parent=5 // pred_check
        _
      $region10: #{tpu_custom_call.1} parent=5 // pred_check_branch
        %145 = sbr.rel (%p142) target = $region12
      $region11: #{tpu_custom_call.1} parent=5 // pred_region
        %s146 = ssub.s32 %s17, 1
        // Predicated region
        $region13: #{tpu_custom_call.1} parent=11 // pred_check
          %p147 = pneg %p64
        $region14: #{tpu_custom_call.1} parent=11 // pred_check_branch
          %149 = sbr.rel (%p147) target = $region16
        $region15: #{tpu_custom_call.1} parent=11 // pred_region
          %s151 = ssub.s32 384, 384
          %152 = vsyncadd [#allocation7], %s151
          %s153 = sshll.u32 [#allocation6], 4
          %s154 = int_to_ptr.vmem [resolvable:$true] %s153
          %159 = dma.hbm_to_vmem [thread:$0]  %s1, 384, %s154, [#allocation7], 128, 128, 8
        $region16: #{tpu_custom_call.1} parent=11 // pred_fallthru
          _
        // Predicated region
        $region17: #{tpu_custom_call.1} parent=11 // pred_check
          %p160 = pneg %p85
        $region18: #{tpu_custom_call.1} parent=11 // pred_check_branch
          %162 = sbr.rel (%p160) target = $region20
        $region19: #{tpu_custom_call.1} parent=11 // pred_region
          _
        $region20: #{tpu_custom_call.1} parent=11 // pred_fallthru
          _
        // Predicated region
        $region21: #{tpu_custom_call.1} parent=11 // pred_check
          %p163 = pneg %p106
        $region22: #{tpu_custom_call.1} parent=11 // pred_check_branch
          %165 = sbr.rel (%p163) target = $region24
        $region23: #{tpu_custom_call.1} parent=11 // pred_region
          _
        $region24: #{tpu_custom_call.1} parent=11 // pred_fallthru
          _
      $region12: #{tpu_custom_call.1} parent=5 // pred_fallthru
        _
      %p166 = scmp.lt.s32.totalorder %s17, 2
      // Predicated region
      $region25: #{tpu_custom_call.1} parent=5 // pred_check
        %p167 = pneg %p166
      $region26: #{tpu_custom_call.1} parent=5 // pred_check_branch
        %169 = sbr.rel (%p167) target = $region28
      $region27: #{tpu_custom_call.1} parent=5 // pred_region
        // Predicated region
        $region29: #{tpu_custom_call.1} parent=27 // pred_check
          %p170 = pneg %p37
        $region30: #{tpu_custom_call.1} parent=27 // pred_check_branch
          %172 = sbr.rel (%p170) target = $region32
        $region31: #{tpu_custom_call.1} parent=27 // pred_region
          %s173 = sand.u32 %s27, 1
          %s174 = scalar_lea.sflag [#allocation4], %s173
          %s175 = sand.u32 %s27, 1
          %s176 = smul.addr %s175, 40
          %s177 = scalar_lea.vmem [#allocation3], %s176
          %s179 = ssub.s32 640, 640
          %180 = vsyncadd %s174, %s179
          %s181 = smul.addr %s17, 10
          %s182 = smul.addr %s181, 64
          %s183 = scalar_lea.hbm %s0, %s182
          %s185 = sshll.u32 %s177, 4
          %s186 = int_to_ptr.vmem [resolvable:$true] %s185
          %188 = dma.hbm_to_vmem [thread:$0]  %s183, 640, %s186, %s174
        $region32: #{tpu_custom_call.1} parent=27 // pred_fallthru
          _
      $region28: #{tpu_custom_call.1} parent=5 // pred_fallthru
        _
      %p189 = scmp.le.s32.totalorder 1, %s17
      %p190 = scmp.lt.s32.totalorder %s17, 3
      %p191 = pnand %p189, %p190
      %p192 = pneg %p191
      // Predicated region
      $region33: #{tpu_custom_call.1} parent=5 // pred_check
        _
      $region34: #{tpu_custom_call.1} parent=5 // pred_check_branch
        %194 = sbr.rel (%p191) target = $region36
      $region35: #{tpu_custom_call.1} parent=5 // pred_region
        %s195 = ssub.s32 %s17, 1
        %s196 = sand.u32 %s30, 1
        %s197 = scalar_lea.sflag [#allocation4], %s196
        %s198 = sand.u32 %s30, 1
        %s199 = smul.addr %s198, 40
        %s200 = scalar_lea.vmem [#allocation3], %s199
        // Predicated region
        $region37: #{tpu_custom_call.1} parent=35 // pred_check
          %p201 = pneg %p43
        $region38: #{tpu_custom_call.1} parent=35 // pred_check_branch
          %203 = sbr.rel (%p201) target = $region40
        $region39: #{tpu_custom_call.1} parent=35 // pred_region
          %204 = dma.done %s197, 640
        $region40: #{tpu_custom_call.1} parent=35 // pred_fallthru
          _
        // Predicated region
        $region41: #{tpu_custom_call.1} parent=35 // pred_check
          %p205 = pneg %p64
        $region42: #{tpu_custom_call.1} parent=35 // pred_check_branch
          %207 = sbr.rel (%p205) target = $region44
        $region43: #{tpu_custom_call.1} parent=35 // pred_region
          %208 = dma.done [#allocation7], 384
        $region44: #{tpu_custom_call.1} parent=35 // pred_fallthru
          _
        %s209 = sand.u32 %s30, 1
        %s210 = scalar_lea.sflag [#allocation4], %s209
        %s211 = sand.u32 %s30, 1
        %s212 = smul.addr %s211, 40
        %s213 = scalar_lea.vmem [#allocation3], %s212
        %p214 = pneg %p43
        %p215 = pneg %p40
        %p216 = pneg %p64
        %p217 = pneg %p61
        %p218 = pneg %p85
        %p219 = pneg %p82
        %p220 = pneg %p106
        %p221 = pneg %p103
        %p222 = pneg %p132
        %p223 = pneg %p129
        %s224 = sand.u32 %s119, 1
        %s225 = scalar_lea.sflag [#allocation5], %s224
        %s226 = sand.u32 %s119, 1
        %s227 = smul.addr %s226, 72
        %s228 = scalar_lea.vmem [#allocation8], %s227
        %v229 = vld [vmem:[%s200] sm:$0xff]
        %v230 = vld [vmem:[%s200 + $0x8] sm:$0xff]
        %v231 = vld [vmem:[%s200 + $0x10] sm:$0xff]
        %v232 = vld [vmem:[%s200 + $0x18] sm:$0xff]
        %v233 = vld [vmem:[%s200 + $0x20] sm:$0xf]
        %v238 = vcombine.high %v229, %v229
        %v239 = vcombine.high %v230, %v230
        %v240 = vcombine.high %v231, %v231
        %v241 = vcombine.high %v232, %v232
        %246 = vst [vmem:[#allocation2] sm:$0xf] %v229
        %247 = vst [vmem:[#allocation2 + $0x8] sm:$0xf] %v238
        %248 = vst [vmem:[#allocation2 + $0x10] sm:$0xf] %v230
        %249 = vst [vmem:[#allocation2 + $0x18] sm:$0xf] %v239
        %250 = vst [vmem:[#allocation2 + $0x20] sm:$0xf] %v231
        %251 = vst [vmem:[#allocation2 + $0x28] sm:$0xf] %v240
        %252 = vst [vmem:[#allocation2 + $0x30] sm:$0xf] %v232
        %253 = vst [vmem:[#allocation2 + $0x38] sm:$0xf] %v241
        %254 = vst [vmem:[#allocation2 + $0x40] sm:$0xf] %v233
        %v255 = vld [vmem:[%s200] sm:$0xff]
        %v256 = vld [vmem:[%s200 + $0x8] sm:$0xff]
        %v257 = vld [vmem:[%s200 + $0x10] sm:$0xff]
        %v258 = vld [vmem:[%s200 + $0x18] sm:$0xff]
        %v259 = vld [vmem:[%s200 + $0x20] sm:$0xff]
        %v265 = vcombine.low %v255, %v255
        %v266 = vcombine.low %v256, %v256
        %v267 = vcombine.low %v257, %v257
        %v268 = vcombine.low %v258, %v258
        %v269 = vcombine.low %v259, %v259
        %270 = vrot.lane.b32.xlu0 %v265, 127
        %v271 = vpop.permute.xlu0 %270
        %272 = vrot.lane.b32.xlu0 %v255, 127
        %v273 = vpop.permute.xlu0 %272
        %274 = vrot.lane.b32.xlu0 %v266, 127
        %v275 = vpop.permute.xlu0 %274
        %276 = vrot.lane.b32.xlu0 %v256, 127
        %v277 = vpop.permute.xlu0 %276
        %278 = vrot.lane.b32.xlu0 %v267, 127
        %v279 = vpop.permute.xlu0 %278
        %280 = vrot.lane.b32.xlu0 %v257, 127
        %v281 = vpop.permute.xlu0 %280
        %282 = vrot.lane.b32.xlu0 %v268, 127
        %v283 = vpop.permute.xlu0 %282
        %284 = vrot.lane.b32.xlu0 %v258, 127
        %v285 = vpop.permute.xlu0 %284
        %286 = vrot.lane.b32.xlu0 %v269, 127
        %v287 = vpop.permute.xlu0 %286
        %288 = vrot.lane.b32.xlu0 %v259, 127
        %v289 = vpop.permute.xlu0 %288
        %vm290 = vcmask 1039360
        %v291 = vsel %vm290, %v271, %v273
        %v292 = vsel %vm290, %v273, %v275
        %v293 = vsel %vm290, %v275, %v277
        %v294 = vsel %vm290, %v277, %v279
        %v295 = vsel %vm290, %v279, %v281
        %v296 = vsel %vm290, %v281, %v283
        %v297 = vsel %vm290, %v283, %v285
        %v298 = vsel %vm290, %v285, %v287
        %v299 = vsel %vm290, %v287, %v289
        %309 = vst [vmem:[#allocation2] sm:$0xf0] %v291
        %310 = vst [vmem:[#allocation2 + $0x8] sm:$0xf0] %v292
        %311 = vst [vmem:[#allocation2 + $0x10] sm:$0xf0] %v293
        %312 = vst [vmem:[#allocation2 + $0x18] sm:$0xf0] %v294
        %313 = vst [vmem:[#allocation2 + $0x20] sm:$0xf0] %v295
        %314 = vst [vmem:[#allocation2 + $0x28] sm:$0xf0] %v296
        %315 = vst [vmem:[#allocation2 + $0x30] sm:$0xf0] %v297
        %316 = vst [vmem:[#allocation2 + $0x38] sm:$0xf0] %v298
        %317 = vst [vmem:[#allocation2 + $0x40] sm:$0xf0] %v299
        %v318 = vld [vmem:[%s200] sm:$0xff]
        %v319 = vld [vmem:[%s200 + $0x8] sm:$0xff]
        %v320 = vld [vmem:[%s200 + $0x10] sm:$0xff]
        %v321 = vld [vmem:[%s200 + $0x18] sm:$0xff]
        %v322 = vld [vmem:[%s200 + $0x20] sm:$0xff]
        %v328 = vcombine.high %v318, %v318
        %v329 = vcombine.high %v319, %v319
        %v330 = vcombine.high %v320, %v320
        %v331 = vcombine.high %v321, %v321
        %v332 = vcombine.high %v322, %v322
        %333 = vrot.lane.b32.xlu0 %v318, 126
        %v334 = vpop.permute.xlu0 %333
        %335 = vrot.lane.b32.xlu0 %v328, 126
        %v336 = vpop.permute.xlu0 %335
        %337 = vrot.lane.b32.xlu0 %v319, 126
        %v338 = vpop.permute.xlu0 %337
        %339 = vrot.lane.b32.xlu0 %v329, 126
        %v340 = vpop.permute.xlu0 %339
        %341 = vrot.lane.b32.xlu0 %v320, 126
        %v342 = vpop.permute.xlu0 %341
        %343 = vrot.lane.b32.xlu0 %v330, 126
        %v344 = vpop.permute.xlu0 %343
        %345 = vrot.lane.b32.xlu0 %v321, 126
        %v346 = vpop.permute.xlu0 %345
        %347 = vrot.lane.b32.xlu0 %v331, 126
        %v348 = vpop.permute.xlu0 %347
        %349 = vrot.lane.b32.xlu0 %v322, 126
        %v350 = vpop.permute.xlu0 %349
        %351 = vrot.lane.b32.xlu0 %v332, 126
        %v352 = vpop.permute.xlu0 %351
        %vm353 = vcmask 1031168
        %v354 = vsel %vm353, %v334, %v336
        %v355 = vsel %vm353, %v336, %v338
        %v356 = vsel %vm353, %v338, %v340
        %v357 = vsel %vm353, %v340, %v342
        %v358 = vsel %vm353, %v342, %v344
        %v359 = vsel %vm353, %v344, %v346
        %v360 = vsel %vm353, %v346, %v348
        %v361 = vsel %vm353, %v348, %v350
        %v362 = vsel %vm353, %v350, %v352
        %372 = vst [vmem:[#allocation2 + $0x48] sm:$0xf] %v354
        %373 = vst [vmem:[#allocation2 + $0x50] sm:$0xf] %v355
        %374 = vst [vmem:[#allocation2 + $0x58] sm:$0xf] %v356
        %375 = vst [vmem:[#allocation2 + $0x60] sm:$0xf] %v357
        %376 = vst [vmem:[#allocation2 + $0x68] sm:$0xf] %v358
        %377 = vst [vmem:[#allocation2 + $0x70] sm:$0xf] %v359
        %378 = vst [vmem:[#allocation2 + $0x78] sm:$0xf] %v360
        %379 = vst [vmem:[#allocation2 + $0x80] sm:$0xf] %v361
        %380 = vst [vmem:[#allocation2 + $0x88] sm:$0xf] %v362
        %v381 = vld [vmem:[#allocation6] sm:$0xff]
        %v382 = vld [vmem:[#allocation2] sm:$0xff]
        %v383 = vld [vmem:[#allocation2 + $0x8] sm:$0xff]
        %v384 = vld [vmem:[#allocation2 + $0x10] sm:$0xff]
        %v385 = vld [vmem:[#allocation2 + $0x18] sm:$0xff]
        %v386 = vld [vmem:[#allocation2 + $0x20] sm:$0xff]
        %v387 = vld [vmem:[#allocation2 + $0x28] sm:$0xff]
        %v388 = vld [vmem:[#allocation2 + $0x30] sm:$0xff]
        %v389 = vld [vmem:[#allocation2 + $0x38] sm:$0xff]
        %v390 = vld [vmem:[#allocation2 + $0x40] sm:$0xff]
        %v391 = vld [vmem:[#allocation2 + $0x48] sm:$0xf]
        %v392 = vld [vmem:[#allocation2 + $0x50] sm:$0xf]
        %v393 = vld [vmem:[#allocation2 + $0x58] sm:$0xf]
        %v394 = vld [vmem:[#allocation2 + $0x60] sm:$0xf]
        %v395 = vld [vmem:[#allocation2 + $0x68] sm:$0xf]
        %v396 = vld [vmem:[#allocation2 + $0x70] sm:$0xf]
        %v397 = vld [vmem:[#allocation2 + $0x78] sm:$0xf]
        %v398 = vld [vmem:[#allocation2 + $0x80] sm:$0xf]
        %v399 = vld [vmem:[#allocation2 + $0x88] sm:$0xf]
        %v400 = vld [vmem:[%s200] sm:$0xff]
        %v401 = vld [vmem:[%s200 + $0x8] sm:$0xff]
        %v402 = vld [vmem:[%s200 + $0x10] sm:$0xff]
        %v403 = vld [vmem:[%s200 + $0x18] sm:$0xff]
        %v404 = vld [vmem:[%s200 + $0x20] sm:$0xff]
        %v410 = vcombine.high %v400, %v400
        %v411 = vcombine.high %v401, %v401
        %v412 = vcombine.high %v402, %v402
        %v413 = vcombine.high %v403, %v403
        %v414 = vcombine.high %v404, %v404
        %415 = vrot.lane.b32.xlu0 %v400, 94
        %v416 = vpop.permute.xlu0 %415
        %417 = vrot.lane.b32.xlu0 %v410, 94
        %v418 = vpop.permute.xlu0 %417
        %419 = vrot.lane.b32.xlu0 %v401, 94
        %v420 = vpop.permute.xlu0 %419
        %421 = vrot.lane.b32.xlu0 %v411, 94
        %v422 = vpop.permute.xlu0 %421
        %423 = vrot.lane.b32.xlu0 %v402, 94
        %v424 = vpop.permute.xlu0 %423
        %425 = vrot.lane.b32.xlu0 %v412, 94
        %v426 = vpop.permute.xlu0 %425
        %427 = vrot.lane.b32.xlu0 %v403, 94
        %v428 = vpop.permute.xlu0 %427
        %429 = vrot.lane.b32.xlu0 %v413, 94
        %v430 = vpop.permute.xlu0 %429
        %431 = vrot.lane.b32.xlu0 %v404, 94
        %v432 = vpop.permute.xlu0 %431
        %433 = vrot.lane.b32.xlu0 %v414, 94
        %v434 = vpop.permute.xlu0 %433
        %vm435 = vcmask 769024
        %v436 = vsel %vm435, %v416, %v418
        %v437 = vsel %vm435, %v418, %v420
        %v438 = vsel %vm435, %v420, %v422
        %v439 = vsel %vm435, %v422, %v424
        %v440 = vsel %vm435, %v424, %v426
        %v441 = vsel %vm435, %v426, %v428
        %v442 = vsel %vm435, %v428, %v430
        %v443 = vsel %vm435, %v430, %v432
        %v444 = vsel %vm435, %v432, %v434
        %454 = vst [vmem:[#allocation2] sm:$0xf] %v436
        %455 = vst [vmem:[#allocation2 + $0x8] sm:$0xf] %v437
        %456 = vst [vmem:[#allocation2 + $0x10] sm:$0xf] %v438
        %457 = vst [vmem:[#allocation2 + $0x18] sm:$0xf] %v439
        %458 = vst [vmem:[#allocation2 + $0x20] sm:$0xf] %v440
        %459 = vst [vmem:[#allocation2 + $0x28] sm:$0xf] %v441
        %460 = vst [vmem:[#allocation2 + $0x30] sm:$0xf] %v442
        %461 = vst [vmem:[#allocation2 + $0x38] sm:$0xf] %v443
        %462 = vst [vmem:[#allocation2 + $0x40] sm:$0xf] %v444
        %v463 = vld [vmem:[%s200] sm:$0xff]
        %v464 = vld [vmem:[%s200 + $0x8] sm:$0xff]
        %v465 = vld [vmem:[%s200 + $0x10] sm:$0xff]
        %v466 = vld [vmem:[%s200 + $0x18] sm:$0xff]
        %v467 = vld [vmem:[%s200 + $0x20] sm:$0xff]
        %v473 = vcombine.low %v463, %v463
        %v474 = vcombine.low %v464, %v464
        %v475 = vcombine.low %v465, %v465
        %v476 = vcombine.low %v466, %v466
        %v477 = vcombine.low %v467, %v467
        %478 = vrot.lane.b32.xlu0 %v473, 93
        %v479 = vpop.permute.xlu0 %478
        %480 = vrot.lane.b32.xlu0 %v463, 93
        %v481 = vpop.permute.xlu0 %480
        %482 = vrot.lane.b32.xlu0 %v474, 93
        %v483 = vpop.permute.xlu0 %482
        %484 = vrot.lane.b32.xlu0 %v464, 93
        %v485 = vpop.permute.xlu0 %484
        %486 = vrot.lane.b32.xlu0 %v475, 93
        %v487 = vpop.permute.xlu0 %486
        %488 = vrot.lane.b32.xlu0 %v465, 93
        %v489 = vpop.permute.xlu0 %488
        %490 = vrot.lane.b32.xlu0 %v476, 93
        %v491 = vpop.permute.xlu0 %490
        %492 = vrot.lane.b32.xlu0 %v466, 93
        %v493 = vpop.permute.xlu0 %492
        %494 = vrot.lane.b32.xlu0 %v477, 93
        %v495 = vpop.permute.xlu0 %494
        %496 = vrot.lane.b32.xlu0 %v467, 93
        %v497 = vpop.permute.xlu0 %496
        %vm498 = vcmask 760832
        %v499 = vsel %vm498, %v479, %v481
        %v500 = vsel %vm498, %v481, %v483
        %v501 = vsel %vm498, %v483, %v485
        %v502 = vsel %vm498, %v485, %v487
        %v503 = vsel %vm498, %v487, %v489
        %v504 = vsel %vm498, %v489, %v491
        %v505 = vsel %vm498, %v491, %v493
        %v506 = vsel %vm498, %v493, %v495
        %v507 = vsel %vm498, %v495, %v497
        %517 = vst [vmem:[#allocation2] sm:$0xf0] %v499
        %518 = vst [vmem:[#allocation2 + $0x8] sm:$0xf0] %v500
        %519 = vst [vmem:[#allocation2 + $0x10] sm:$0xf0] %v501
        %520 = vst [vmem:[#allocation2 + $0x18] sm:$0xf0] %v502
        %521 = vst [vmem:[#allocation2 + $0x20] sm:$0xf0] %v503
        %522 = vst [vmem:[#allocation2 + $0x28] sm:$0xf0] %v504
        %523 = vst [vmem:[#allocation2 + $0x30] sm:$0xf0] %v505
        %524 = vst [vmem:[#allocation2 + $0x38] sm:$0xf0] %v506
        %525 = vst [vmem:[#allocation2 + $0x40] sm:$0xf0] %v507
        %v526 = vld [vmem:[%s200] sm:$0xff]
        %v527 = vld [vmem:[%s200 + $0x8] sm:$0xff]
        %v528 = vld [vmem:[%s200 + $0x10] sm:$0xff]
        %v529 = vld [vmem:[%s200 + $0x18] sm:$0xff]
        %v530 = vld [vmem:[%s200 + $0x20] sm:$0xff]
        %v536 = vcombine.high %v526, %v526
        %v537 = vcombine.high %v527, %v527
        %v538 = vcombine.high %v528, %v528
        %v539 = vcombine.high %v529, %v529
        %v540 = vcombine.high %v530, %v530
        %541 = vrot.lane.b32.xlu0 %v526, 92
        %v542 = vpop.permute.xlu0 %541
        %543 = vrot.lane.b32.xlu0 %v536, 92
        %v544 = vpop.permute.xlu0 %543
        %545 = vrot.lane.b32.xlu0 %v527, 92
        %v546 = vpop.permute.xlu0 %545
        %547 = vrot.lane.b32.xlu0 %v537, 92
        %v548 = vpop.permute.xlu0 %547
        %549 = vrot.lane.b32.xlu0 %v528, 92
        %v550 = vpop.permute.xlu0 %549
        %551 = vrot.lane.b32.xlu0 %v538, 92
        %v552 = vpop.permute.xlu0 %551
        %553 = vrot.lane.b32.xlu0 %v529, 92
        %v554 = vpop.permute.xlu0 %553
        %555 = vrot.lane.b32.xlu0 %v539, 92
        %v556 = vpop.permute.xlu0 %555
        %557 = vrot.lane.b32.xlu0 %v530, 92
        %v558 = vpop.permute.xlu0 %557
        %559 = vrot.lane.b32.xlu0 %v540, 92
        %v560 = vpop.permute.xlu0 %559
        %vm561 = vcmask 752640
        %v562 = vsel %vm561, %v542, %v544
        %v563 = vsel %vm561, %v544, %v546
        %v564 = vsel %vm561, %v546, %v548
        %v565 = vsel %vm561, %v548, %v550
        %v566 = vsel %vm561, %v550, %v552
        %v567 = vsel %vm561, %v552, %v554
        %v568 = vsel %vm561, %v554, %v556
        %v569 = vsel %vm561, %v556, %v558
        %v570 = vsel %vm561, %v558, %v560
        %580 = vst [vmem:[#allocation2 + $0x48] sm:$0xf] %v562
        %581 = vst [vmem:[#allocation2 + $0x50] sm:$0xf] %v563
        %582 = vst [vmem:[#allocation2 + $0x58] sm:$0xf] %v564
        %583 = vst [vmem:[#allocation2 + $0x60] sm:$0xf] %v565
        %584 = vst [vmem:[#allocation2 + $0x68] sm:$0xf] %v566
        %585 = vst [vmem:[#allocation2 + $0x70] sm:$0xf] %v567
        %586 = vst [vmem:[#allocation2 + $0x78] sm:$0xf] %v568
        %587 = vst [vmem:[#allocation2 + $0x80] sm:$0xf] %v569
        %588 = vst [vmem:[#allocation2 + $0x88] sm:$0xf] %v570
        %s589 = scalar_lea.vmem [#allocation6], 8
        %v590 = vld [vmem:[%s589] sm:$0xff]
        %v591 = vld [vmem:[#allocation2] sm:$0xff]
        %v592 = vld [vmem:[#allocation2 + $0x8] sm:$0xff]
        %v593 = vld [vmem:[#allocation2 + $0x10] sm:$0xff]
        %v594 = vld [vmem:[#allocation2 + $0x18] sm:$0xff]
        %v595 = vld [vmem:[#allocation2 + $0x20] sm:$0xff]
        %v596 = vld [vmem:[#allocation2 + $0x28] sm:$0xff]
        %v597 = vld [vmem:[#allocation2 + $0x30] sm:$0xff]
        %v598 = vld [vmem:[#allocation2 + $0x38] sm:$0xff]
        %v599 = vld [vmem:[#allocation2 + $0x40] sm:$0xff]
        %v600 = vld [vmem:[#allocation2 + $0x48] sm:$0xf]
        %v601 = vld [vmem:[#allocation2 + $0x50] sm:$0xf]
        %v602 = vld [vmem:[#allocation2 + $0x58] sm:$0xf]
        %v603 = vld [vmem:[#allocation2 + $0x60] sm:$0xf]
        %v604 = vld [vmem:[#allocation2 + $0x68] sm:$0xf]
        %v605 = vld [vmem:[#allocation2 + $0x70] sm:$0xf]
        %v606 = vld [vmem:[#allocation2 + $0x78] sm:$0xf]
        %v607 = vld [vmem:[#allocation2 + $0x80] sm:$0xf]
        %v608 = vld [vmem:[#allocation2 + $0x88] sm:$0xf]
        %vm609 = vcmask 97280
        %v611 = vsel %vm609, %v590, 0
        %vm613 = vcmask 1043456
        %v615 = vsel %vm613, %v600, 0
        %v618 = vsel %vm613, %v601, 0
        %v621 = vsel %vm613, %v602, 0
        %v624 = vsel %vm613, %v603, 0
        %v627 = vsel %vm613, %v604, 0
        %v630 = vsel %vm613, %v605, 0
        %v633 = vsel %vm613, %v606, 0
        %v636 = vsel %vm613, %v607, 0
        %v639 = vsel %vm613, %v608, 0
        %641 = vmatprep.subr.mxu0 %v592
        %642 = vmatpush1.msra.mxu0 %v591
        %643 = vmatprep.subr.mxu0 %v618
        %644 = vmatpush1.msra.mxu0 %v615
        %645 = vmatprep.subr.mxu0 0.0
        %646 = vmatpush1.msra.mxu0 0.0
        %647 = vmatprep.subr.mxu0 0.0
        %648 = vmatpush1.msra.mxu0 0.0
        %649 = vmatprep.subr.mxu0 0.0
        %650 = vmatpush1.msra.mxu0 0.0
        %651 = vmatprep.subr.mxu0 0.0
        %652 = vmatpush1.msra.mxu0 0.0
        %653 = vmatprep.subr.mxu0 0.0
        %654 = vmatpush1.msra.mxu0 0.0
        %655 = vmatprep.subr.mxu0 0.0
        %656 = vmatpush1.msra.mxu0 0.0
        %657 = vmatprep.subr.mxu0 0.0
        %658 = vmatpush1.msra.mxu0 0.0
        %659 = vmatprep.subr.mxu0 0.0
        %660 = vmatpush1.msra.mxu0 0.0
        %661 = vmatprep.subr.mxu0 0.0
        %662 = vmatpush1.msra.mxu0 0.0
        %663 = vmatprep.subr.mxu0 0.0
        %664 = vmatpush1.msra.mxu0 0.0
        %665 = vmatprep.subr.mxu0 0.0
        %666 = vmatpush1.msra.mxu0 0.0
        %667 = vmatprep.subr.mxu0 0.0
        %668 = vmatpush1.msra.mxu0 0.0
        %669 = vmatprep.subr.mxu0 0.0
        %670 = vmatpush1.msra.mxu0 0.0
        %671 = vmatprep.subr.mxu0 0.0
        %672 = vmatpush1.msra.mxu0 0.0
        %673 = vmatprep.subr.mxu0 0.0
        %674 = vmatpush1.msra.mxu0 0.0
        %675 = vmatprep.subr.mxu0 0.0
        %676 = vmatpush1.msra.mxu0 0.0
        %677 = vmatprep.subr.mxu0 0.0
        %678 = vmatpush1.msra.mxu0 0.0
        %679 = vmatprep.subr.mxu0 0.0
        %680 = vmatpush1.msra.mxu0 0.0
        %681 = vmatprep.subr.mxu0 0.0
        %682 = vmatpush1.msra.mxu0 0.0
        %683 = vmatprep.subr.mxu0 0.0
        %684 = vmatpush1.msra.mxu0 0.0
        %685 = vmatprep.subr.mxu0 0.0
        %686 = vmatpush1.msra.mxu0 0.0
        %687 = vmatprep.subr.mxu0 0.0
        %688 = vmatpush1.msra.mxu0 0.0
        %689 = vmatprep.subr.mxu0 0.0
        %690 = vmatpush1.msra.mxu0 0.0
        %691 = vmatprep.subr.mxu0 0.0
        %692 = vmatpush1.msra.mxu0 0.0
        %693 = vmatprep.subr.mxu0 0.0
        %694 = vmatpush1.msra.mxu0 0.0
        %695 = vmatprep.subr.mxu0 0.0
        %696 = vmatpush1.msra.mxu0 0.0
        %697 = vmatprep.subr.mxu0 0.0
        %698 = vmatpush1.msra.mxu0 0.0
        %699 = vmatprep.subr.mxu0 0.0
        %700 = vmatpush1.msra.mxu0 0.0
        %701 = vmatprep.subr.mxu0 0.0
        %702 = vmatpush1.msra.mxu0 0.0
        %703 = vmatprep.subr.mxu0 0.0
        %704 = vmatpush1.msra.mxu0 0.0
        %705 = vmatprep.mubr.f32.mxu0 0.0
        %706 = vmatmul.mubr.f32.gmra.mrb[0].mxu0 %v611
        %v707 = vpop.f32.mrb[0].mxu0
        %v708 = vadd.f32 0.0, %v707
        %v709 = vpop.f32.mrb[0].mxu0
        %v710 = vadd.f32 0.0, %v709
        %711 = vdwg.mxu0
        %712 = vmatprep.subr.mxu0 %v594
        %713 = vmatpush1.msra.mxu0 %v593
        %714 = vmatprep.subr.mxu0 %v624
        %715 = vmatpush1.msra.mxu0 %v621
        %716 = vmatprep.subr.mxu0 0.0
        %717 = vmatpush1.msra.mxu0 0.0
        %718 = vmatprep.subr.mxu0 0.0
        %719 = vmatpush1.msra.mxu0 0.0
        %720 = vmatprep.subr.mxu0 0.0
        %721 = vmatpush1.msra.mxu0 0.0
        %722 = vmatprep.subr.mxu0 0.0
        %723 = vmatpush1.msra.mxu0 0.0
        %724 = vmatprep.subr.mxu0 0.0
        %725 = vmatpush1.msra.mxu0 0.0
        %726 = vmatprep.subr.mxu0 0.0
        %727 = vmatpush1.msra.mxu0 0.0
        %728 = vmatprep.subr.mxu0 0.0
        %729 = vmatpush1.msra.mxu0 0.0
        %730 = vmatprep.subr.mxu0 0.0
        %731 = vmatpush1.msra.mxu0 0.0
        %732 = vmatprep.subr.mxu0 0.0
        %733 = vmatpush1.msra.mxu0 0.0
        %734 = vmatprep.subr.mxu0 0.0
        %735 = vmatpush1.msra.mxu0 0.0
        %736 = vmatprep.subr.mxu0 0.0
        %737 = vmatpush1.msra.mxu0 0.0
        %738 = vmatprep.subr.mxu0 0.0
        %739 = vmatpush1.msra.mxu0 0.0
        %740 = vmatprep.subr.mxu0 0.0
        %741 = vmatpush1.msra.mxu0 0.0
        %742 = vmatprep.subr.mxu0 0.0
        %743 = vmatpush1.msra.mxu0 0.0
        %744 = vmatprep.subr.mxu0 0.0
        %745 = vmatpush1.msra.mxu0 0.0
        %746 = vmatprep.subr.mxu0 0.0
        %747 = vmatpush1.msra.mxu0 0.0
        %748 = vmatprep.subr.mxu0 0.0
        %749 = vmatpush1.msra.mxu0 0.0
        %750 = vmatprep.subr.mxu0 0.0
        %751 = vmatpush1.msra.mxu0 0.0
        %752 = vmatprep.subr.mxu0 0.0
        %753 = vmatpush1.msra.mxu0 0.0
        %754 = vmatprep.subr.mxu0 0.0
        %755 = vmatpush1.msra.mxu0 0.0
        %756 = vmatprep.subr.mxu0 0.0
        %757 = vmatpush1.msra.mxu0 0.0
        %758 = vmatprep.subr.mxu0 0.0
        %759 = vmatpush1.msra.mxu0 0.0
        %760 = vmatprep.subr.mxu0 0.0
        %761 = vmatpush1.msra.mxu0 0.0
        %762 = vmatprep.subr.mxu0 0.0
        %763 = vmatpush1.msra.mxu0 0.0
        %764 = vmatprep.subr.mxu0 0.0
        %765 = vmatpush1.msra.mxu0 0.0
        %766 = vmatprep.subr.mxu0 0.0
        %767 = vmatpush1.msra.mxu0 0.0
        %768 = vmatprep.subr.mxu0 0.0
        %769 = vmatpush1.msra.mxu0 0.0
        %770 = vmatprep.subr.mxu0 0.0
        %771 = vmatpush1.msra.mxu0 0.0
        %772 = vmatprep.subr.mxu0 0.0
        %773 = vmatpush1.msra.mxu0 0.0
        %774 = vmatprep.subr.mxu0 0.0
        %775 = vmatpush1.msra.mxu0 0.0
        %776 = vmatprep.mubr.f32.mxu0 0.0
        %777 = vmatmul.mubr.f32.gmra.mrb[0].mxu0 %v611
        %v778 = vpop.f32.mrb[0].mxu0
        %v779 = vadd.f32 0.0, %v778
        %v780 = vpop.f32.mrb[0].mxu0
        %v781 = vadd.f32 0.0, %v780
        %782 = vdwg.mxu0
        %783 = vmatprep.subr.mxu0 %v596
        %784 = vmatpush1.msra.mxu0 %v595
        %785 = vmatprep.subr.mxu0 %v630
        %786 = vmatpush1.msra.mxu0 %v627
        %787 = vmatprep.subr.mxu0 0.0
        %788 = vmatpush1.msra.mxu0 0.0
        %789 = vmatprep.subr.mxu0 0.0
        %790 = vmatpush1.msra.mxu0 0.0
        %791 = vmatprep.subr.mxu0 0.0
        %792 = vmatpush1.msra.mxu0 0.0
        %793 = vmatprep.subr.mxu0 0.0
        %794 = vmatpush1.msra.mxu0 0.0
        %795 = vmatprep.subr.mxu0 0.0
        %796 = vmatpush1.msra.mxu0 0.0
        %797 = vmatprep.subr.mxu0 0.0
        %798 = vmatpush1.msra.mxu0 0.0
        %799 = vmatprep.subr.mxu0 0.0
        %800 = vmatpush1.msra.mxu0 0.0
        %801 = vmatprep.subr.mxu0 0.0
        %802 = vmatpush1.msra.mxu0 0.0
        %803 = vmatprep.subr.mxu0 0.0
        %804 = vmatpush1.msra.mxu0 0.0
        %805 = vmatprep.subr.mxu0 0.0
        %806 = vmatpush1.msra.mxu0 0.0
        %807 = vmatprep.subr.mxu0 0.0
        %808 = vmatpush1.msra.mxu0 0.0
        %809 = vmatprep.subr.mxu0 0.0
        %810 = vmatpush1.msra.mxu0 0.0
        %811 = vmatprep.subr.mxu0 0.0
        %812 = vmatpush1.msra.mxu0 0.0
        %813 = vmatprep.subr.mxu0 0.0
        %814 = vmatpush1.msra.mxu0 0.0
        %815 = vmatprep.subr.mxu0 0.0
        %816 = vmatpush1.msra.mxu0 0.0
        %817 = vmatprep.subr.mxu0 0.0
        %818 = vmatpush1.msra.mxu0 0.0
        %819 = vmatprep.subr.mxu0 0.0
        %820 = vmatpush1.msra.mxu0 0.0
        %821 = vmatprep.subr.mxu0 0.0
        %822 = vmatpush1.msra.mxu0 0.0
        %823 = vmatprep.subr.mxu0 0.0
        %824 = vmatpush1.msra.mxu0 0.0
        %825 = vmatprep.subr.mxu0 0.0
        %826 = vmatpush1.msra.mxu0 0.0
        %827 = vmatprep.subr.mxu0 0.0
        %828 = vmatpush1.msra.mxu0 0.0
        %829 = vmatprep.subr.mxu0 0.0
        %830 = vmatpush1.msra.mxu0 0.0
        %831 = vmatprep.subr.mxu0 0.0
        %832 = vmatpush1.msra.mxu0 0.0
        %833 = vmatprep.subr.mxu0 0.0
        %834 = vmatpush1.msra.mxu0 0.0
        %835 = vmatprep.subr.mxu0 0.0
        %836 = vmatpush1.msra.mxu0 0.0
        %837 = vmatprep.subr.mxu0 0.0
        %838 = vmatpush1.msra.mxu0 0.0
        %839 = vmatprep.subr.mxu0 0.0
        %840 = vmatpush1.msra.mxu0 0.0
        %841 = vmatprep.subr.mxu0 0.0
        %842 = vmatpush1.msra.mxu0 0.0
        %843 = vmatprep.subr.mxu0 0.0
        %844 = vmatpush1.msra.mxu0 0.0
        %845 = vmatprep.subr.mxu0 0.0
        %846 = vmatpush1.msra.mxu0 0.0
        %847 = vmatprep.mubr.f32.mxu0 0.0
        %848 = vmatmul.mubr.f32.gmra.mrb[0].mxu0 %v611
        %v849 = vpop.f32.mrb[0].mxu0
        %v850 = vadd.f32 0.0, %v849
        %v851 = vpop.f32.mrb[0].mxu0
        %v852 = vadd.f32 0.0, %v851
        %853 = vdwg.mxu0
        %854 = vmatprep.subr.mxu0 %v598
        %855 = vmatpush1.msra.mxu0 %v597
        %856 = vmatprep.subr.mxu0 %v636
        %857 = vmatpush1.msra.mxu0 %v633
        %858 = vmatprep.subr.mxu0 0.0
        %859 = vmatpush1.msra.mxu0 0.0
        %860 = vmatprep.subr.mxu0 0.0
        %861 = vmatpush1.msra.mxu0 0.0
        %862 = vmatprep.subr.mxu0 0.0
        %863 = vmatpush1.msra.mxu0 0.0
        %864 = vmatprep.subr.mxu0 0.0
        %865 = vmatpush1.msra.mxu0 0.0
        %866 = vmatprep.subr.mxu0 0.0
        %867 = vmatpush1.msra.mxu0 0.0
        %868 = vmatprep.subr.mxu0 0.0
        %869 = vmatpush1.msra.mxu0 0.0
        %870 = vmatprep.subr.mxu0 0.0
        %871 = vmatpush1.msra.mxu0 0.0
        %872 = vmatprep.subr.mxu0 0.0
        %873 = vmatpush1.msra.mxu0 0.0
        %874 = vmatprep.subr.mxu0 0.0
        %875 = vmatpush1.msra.mxu0 0.0
        %876 = vmatprep.subr.mxu0 0.0
        %877 = vmatpush1.msra.mxu0 0.0
        %878 = vmatprep.subr.mxu0 0.0
        %879 = vmatpush1.msra.mxu0 0.0
        %880 = vmatprep.subr.mxu0 0.0
        %881 = vmatpush1.msra.mxu0 0.0
        %882 = vmatprep.subr.mxu0 0.0
        %883 = vmatpush1.msra.mxu0 0.0
        %884 = vmatprep.subr.mxu0 0.0
        %885 = vmatpush1.msra.mxu0 0.0
        %886 = vmatprep.subr.mxu0 0.0
        %887 = vmatpush1.msra.mxu0 0.0
        %888 = vmatprep.subr.mxu0 0.0
        %889 = vmatpush1.msra.mxu0 0.0
        %890 = vmatprep.subr.mxu0 0.0
        %891 = vmatpush1.msra.mxu0 0.0
        %892 = vmatprep.subr.mxu0 0.0
        %893 = vmatpush1.msra.mxu0 0.0
        %894 = vmatprep.subr.mxu0 0.0
        %895 = vmatpush1.msra.mxu0 0.0
        %896 = vmatprep.subr.mxu0 0.0
        %897 = vmatpush1.msra.mxu0 0.0
        %898 = vmatprep.subr.mxu0 0.0
        %899 = vmatpush1.msra.mxu0 0.0
        %900 = vmatprep.subr.mxu0 0.0
        %901 = vmatpush1.msra.mxu0 0.0
        %902 = vmatprep.subr.mxu0 0.0
        %903 = vmatpush1.msra.mxu0 0.0
        %904 = vmatprep.subr.mxu0 0.0
        %905 = vmatpush1.msra.mxu0 0.0
        %906 = vmatprep.subr.mxu0 0.0
        %907 = vmatpush1.msra.mxu0 0.0
        %908 = vmatprep.subr.mxu0 0.0
        %909 = vmatpush1.msra.mxu0 0.0
        %910 = vmatprep.subr.mxu0 0.0
        %911 = vmatpush1.msra.mxu0 0.0
        %912 = vmatprep.subr.mxu0 0.0
        %913 = vmatpush1.msra.mxu0 0.0
        %914 = vmatprep.subr.mxu0 0.0
        %915 = vmatpush1.msra.mxu0 0.0
        %916 = vmatprep.subr.mxu0 0.0
        %917 = vmatpush1.msra.mxu0 0.0
        %918 = vmatprep.mubr.f32.mxu0 0.0
        %919 = vmatmul.mubr.f32.gmra.mrb[0].mxu0 %v611
        %v920 = vpop.f32.mrb[0].mxu0
        %v921 = vadd.f32 0.0, %v920
        %v922 = vpop.f32.mrb[0].mxu0
        %v923 = vadd.f32 0.0, %v922
        %924 = vdwg.mxu0
        %925 = vmatprep.subr.mxu0 0.0
        %926 = vmatpush1.msra.mxu0 %v599
        %927 = vmatprep.subr.mxu0 0.0
        %928 = vmatpush1.msra.mxu0 %v639
        %929 = vmatprep.subr.mxu0 0.0
        %930 = vmatpush1.msra.mxu0 0.0
        %931 = vmatprep.subr.mxu0 0.0
        %932 = vmatpush1.msra.mxu0 0.0
        %933 = vmatprep.subr.mxu0 0.0
        %934 = vmatpush1.msra.mxu0 0.0
        %935 = vmatprep.subr.mxu0 0.0
        %936 = vmatpush1.msra.mxu0 0.0
        %937 = vmatprep.subr.mxu0 0.0
        %938 = vmatpush1.msra.mxu0 0.0
        %939 = vmatprep.subr.mxu0 0.0
        %940 = vmatpush1.msra.mxu0 0.0
        %941 = vmatprep.subr.mxu0 0.0
        %942 = vmatpush1.msra.mxu0 0.0
        %943 = vmatprep.subr.mxu0 0.0
        %944 = vmatpush1.msra.mxu0 0.0
        %945 = vmatprep.subr.mxu0 0.0
        %946 = vmatpush1.msra.mxu0 0.0
        %947 = vmatprep.subr.mxu0 0.0
        %948 = vmatpush1.msra.mxu0 0.0
        %949 = vmatprep.subr.mxu0 0.0
        %950 = vmatpush1.msra.mxu0 0.0
        %951 = vmatprep.subr.mxu0 0.0
        %952 = vmatpush1.msra.mxu0 0.0
        %953 = vmatprep.subr.mxu0 0.0
        %954 = vmatpush1.msra.mxu0 0.0
        %955 = vmatprep.subr.mxu0 0.0
        %956 = vmatpush1.msra.mxu0 0.0
        %957 = vmatprep.subr.mxu0 0.0
        %958 = vmatpush1.msra.mxu0 0.0
        %959 = vmatprep.subr.mxu0 0.0
        %960 = vmatpush1.msra.mxu0 0.0
        %961 = vmatprep.subr.mxu0 0.0
        %962 = vmatpush1.msra.mxu0 0.0
        %963 = vmatprep.subr.mxu0 0.0
        %964 = vmatpush1.msra.mxu0 0.0
        %965 = vmatprep.subr.mxu0 0.0
        %966 = vmatpush1.msra.mxu0 0.0
        %967 = vmatprep.subr.mxu0 0.0
        %968 = vmatpush1.msra.mxu0 0.0
        %969 = vmatprep.subr.mxu0 0.0
        %970 = vmatpush1.msra.mxu0 0.0
        %971 = vmatprep.subr.mxu0 0.0
        %972 = vmatpush1.msra.mxu0 0.0
        %973 = vmatprep.subr.mxu0 0.0
        %974 = vmatpush1.msra.mxu0 0.0
        %975 = vmatprep.subr.mxu0 0.0
        %976 = vmatpush1.msra.mxu0 0.0
        %977 = vmatprep.subr.mxu0 0.0
        %978 = vmatpush1.msra.mxu0 0.0
        %979 = vmatprep.subr.mxu0 0.0
        %980 = vmatpush1.msra.mxu0 0.0
        %981 = vmatprep.subr.mxu0 0.0
        %982 = vmatpush1.msra.mxu0 0.0
        %983 = vmatprep.subr.mxu0 0.0
        %984 = vmatpush1.msra.mxu0 0.0
        %985 = vmatprep.subr.mxu0 0.0
        %986 = vmatpush1.msra.mxu0 0.0
        %987 = vmatprep.subr.mxu0 0.0
        %988 = vmatpush1.msra.mxu0 0.0
        %989 = vmatprep.mubr.f32.mxu0 0.0
        %990 = vmatmul.mubr.f32.gmra.mrb[0].mxu0 %v611
        %v991 = vpop.f32.mrb[0].mxu0
        %v992 = vadd.f32 0.0, %v991
        %v993 = vpop.f32.mrb[0].mxu0
        %994 = vdwg.mxu0
        %v996 = vsel %vm609, %v381, 0
        %v999 = vsel %vm613, %v391, 0
        %v1002 = vsel %vm613, %v392, 0
        %v1005 = vsel %vm613, %v393, 0
        %v1008 = vsel %vm613, %v394, 0
        %v1011 = vsel %vm613, %v395, 0
        %v1014 = vsel %vm613, %v396, 0
        %v1017 = vsel %vm613, %v397, 0
        %v1020 = vsel %vm613, %v398, 0
        %v1023 = vsel %vm613, %v399, 0
        %1025 = vmatprep.subr.mxu0 %v383
        %1026 = vmatpush1.msra.mxu0 %v382
        %1027 = vmatprep.subr.mxu0 %v1002
        %1028 = vmatpush1.msra.mxu0 %v999
        %1029 = vmatprep.subr.mxu0 0.0
        %1030 = vmatpush1.msra.mxu0 0.0
        %1031 = vmatprep.subr.mxu0 0.0
        %1032 = vmatpush1.msra.mxu0 0.0
        %1033 = vmatprep.subr.mxu0 0.0
        %1034 = vmatpush1.msra.mxu0 0.0
        %1035 = vmatprep.subr.mxu0 0.0
        %1036 = vmatpush1.msra.mxu0 0.0
        %1037 = vmatprep.subr.mxu0 0.0
        %1038 = vmatpush1.msra.mxu0 0.0
        %1039 = vmatprep.subr.mxu0 0.0
        %1040 = vmatpush1.msra.mxu0 0.0
        %1041 = vmatprep.subr.mxu0 0.0
        %1042 = vmatpush1.msra.mxu0 0.0
        %1043 = vmatprep.subr.mxu0 0.0
        %1044 = vmatpush1.msra.mxu0 0.0
        %1045 = vmatprep.subr.mxu0 0.0
        %1046 = vmatpush1.msra.mxu0 0.0
        %1047 = vmatprep.subr.mxu0 0.0
        %1048 = vmatpush1.msra.mxu0 0.0
        %1049 = vmatprep.subr.mxu0 0.0
        %1050 = vmatpush1.msra.mxu0 0.0
        %1051 = vmatprep.subr.mxu0 0.0
        %1052 = vmatpush1.msra.mxu0 0.0
        %1053 = vmatprep.subr.mxu0 0.0
        %1054 = vmatpush1.msra.mxu0 0.0
        %1055 = vmatprep.subr.mxu0 0.0
        %1056 = vmatpush1.msra.mxu0 0.0
        %1057 = vmatprep.subr.mxu0 0.0
        %1058 = vmatpush1.msra.mxu0 0.0
        %1059 = vmatprep.subr.mxu0 0.0
        %1060 = vmatpush1.msra.mxu0 0.0
        %1061 = vmatprep.subr.mxu0 0.0
        %1062 = vmatpush1.msra.mxu0 0.0
        %1063 = vmatprep.subr.mxu0 0.0
        %1064 = vmatpush1.msra.mxu0 0.0
        %1065 = vmatprep.subr.mxu0 0.0
        %1066 = vmatpush1.msra.mxu0 0.0
        %1067 = vmatprep.subr.mxu0 0.0
        %1068 = vmatpush1.msra.mxu0 0.0
        %1069 = vmatprep.subr.mxu0 0.0
        %1070 = vmatpush1.msra.mxu0 0.0
        %1071 = vmatprep.subr.mxu0 0.0
        %1072 = vmatpush1.msra.mxu0 0.0
        %1073 = vmatprep.subr.mxu0 0.0
        %1074 = vmatpush1.msra.mxu0 0.0
        %1075 = vmatprep.subr.mxu0 0.0
        %1076 = vmatpush1.msra.mxu0 0.0
        %1077 = vmatprep.subr.mxu0 0.0
        %1078 = vmatpush1.msra.mxu0 0.0
        %1079 = vmatprep.subr.mxu0 0.0
        %1080 = vmatpush1.msra.mxu0 0.0
        %1081 = vmatprep.subr.mxu0 0.0
        %1082 = vmatpush1.msra.mxu0 0.0
        %1083 = vmatprep.subr.mxu0 0.0
        %1084 = vmatpush1.msra.mxu0 0.0
        %1085 = vmatprep.subr.mxu0 0.0
        %1086 = vmatpush1.msra.mxu0 0.0
        %1087 = vmatprep.subr.mxu0 0.0
        %1088 = vmatpush1.msra.mxu0 0.0
        %1089 = vmatprep.mubr.f32.mxu0 0.0
        %1090 = vmatmul.mubr.f32.gmra.mrb[0].mxu0 %v996
        %v1091 = vpop.f32.mrb[0].mxu0
        %v1092 = vadd.f32 %v708, %v1091
        %v1093 = vpop.f32.mrb[0].mxu0
        %v1094 = vadd.f32 %v710, %v1093
        %1095 = vdwg.mxu0
        %1096 = vmatprep.subr.mxu0 %v385
        %1097 = vmatpush1.msra.mxu0 %v384
        %1098 = vmatprep.subr.mxu0 %v1008
        %1099 = vmatpush1.msra.mxu0 %v1005
        %1100 = vmatprep.subr.mxu0 0.0
        %1101 = vmatpush1.msra.mxu0 0.0
        %1102 = vmatprep.subr.mxu0 0.0
        %1103 = vmatpush1.msra.mxu0 0.0
        %1104 = vmatprep.subr.mxu0 0.0
        %1105 = vmatpush1.msra.mxu0 0.0
        %1106 = vmatprep.subr.mxu0 0.0
        %1107 = vmatpush1.msra.mxu0 0.0
        %1108 = vmatprep.subr.mxu0 0.0
        %1109 = vmatpush1.msra.mxu0 0.0
        %1110 = vmatprep.subr.mxu0 0.0
        %1111 = vmatpush1.msra.mxu0 0.0
        %1112 = vmatprep.subr.mxu0 0.0
        %1113 = vmatpush1.msra.mxu0 0.0
        %1114 = vmatprep.subr.mxu0 0.0
        %1115 = vmatpush1.msra.mxu0 0.0
        %1116 = vmatprep.subr.mxu0 0.0
        %1117 = vmatpush1.msra.mxu0 0.0
        %1118 = vmatprep.subr.mxu0 0.0
        %1119 = vmatpush1.msra.mxu0 0.0
        %1120 = vmatprep.subr.mxu0 0.0
        %1121 = vmatpush1.msra.mxu0 0.0
        %1122 = vmatprep.subr.mxu0 0.0
        %1123 = vmatpush1.msra.mxu0 0.0
        %1124 = vmatprep.subr.mxu0 0.0
        %1125 = vmatpush1.msra.mxu0 0.0
        %1126 = vmatprep.subr.mxu0 0.0
        %1127 = vmatpush1.msra.mxu0 0.0
        %1128 = vmatprep.subr.mxu0 0.0
        %1129 = vmatpush1.msra.mxu0 0.0
        %1130 = vmatprep.subr.mxu0 0.0
        %1131 = vmatpush1.msra.mxu0 0.0
        %1132 = vmatprep.subr.mxu0 0.0
        %1133 = vmatpush1.msra.mxu0 0.0
        %1134 = vmatprep.subr.mxu0 0.0
        %1135 = vmatpush1.msra.mxu0 0.0
        %1136 = vmatprep.subr.mxu0 0.0
        %1137 = vmatpush1.msra.mxu0 0.0
        %1138 = vmatprep.subr.mxu0 0.0
        %1139 = vmatpush1.msra.mxu0 0.0
        %1140 = vmatprep.subr.mxu0 0.0
        %1141 = vmatpush1.msra.mxu0 0.0
        %1142 = vmatprep.subr.mxu0 0.0
        %1143 = vmatpush1.msra.mxu0 0.0
        %1144 = vmatprep.subr.mxu0 0.0
        %1145 = vmatpush1.msra.mxu0 0.0
        %1146 = vmatprep.subr.mxu0 0.0
        %1147 = vmatpush1.msra.mxu0 0.0
        %1148 = vmatprep.subr.mxu0 0.0
        %1149 = vmatpush1.msra.mxu0 0.0
        %1150 = vmatprep.subr.mxu0 0.0
        %1151 = vmatpush1.msra.mxu0 0.0
        %1152 = vmatprep.subr.mxu0 0.0
        %1153 = vmatpush1.msra.mxu0 0.0
        %1154 = vmatprep.subr.mxu0 0.0
        %1155 = vmatpush1.msra.mxu0 0.0
        %1156 = vmatprep.subr.mxu0 0.0
        %1157 = vmatpush1.msra.mxu0 0.0
        %1158 = vmatprep.subr.mxu0 0.0
        %1159 = vmatpush1.msra.mxu0 0.0
        %1160 = vmatprep.mubr.f32.mxu0 0.0
        %1161 = vmatmul.mubr.f32.gmra.mrb[0].mxu0 %v996
        %v1162 = vpop.f32.mrb[0].mxu0
        %v1163 = vadd.f32 %v779, %v1162
        %v1164 = vpop.f32.mrb[0].mxu0
        %v1165 = vadd.f32 %v781, %v1164
        %1166 = vdwg.mxu0
        %1167 = vmatprep.subr.mxu0 %v387
        %1168 = vmatpush1.msra.mxu0 %v386
        %1169 = vmatprep.subr.mxu0 %v1014
        %1170 = vmatpush1.msra.mxu0 %v1011
        %1171 = vmatprep.subr.mxu0 0.0
        %1172 = vmatpush1.msra.mxu0 0.0
        %1173 = vmatprep.subr.mxu0 0.0
        %1174 = vmatpush1.msra.mxu0 0.0
        %1175 = vmatprep.subr.mxu0 0.0
        %1176 = vmatpush1.msra.mxu0 0.0
        %1177 = vmatprep.subr.mxu0 0.0
        %1178 = vmatpush1.msra.mxu0 0.0
        %1179 = vmatprep.subr.mxu0 0.0
        %1180 = vmatpush1.msra.mxu0 0.0
        %1181 = vmatprep.subr.mxu0 0.0
        %1182 = vmatpush1.msra.mxu0 0.0
        %1183 = vmatprep.subr.mxu0 0.0
        %1184 = vmatpush1.msra.mxu0 0.0
        %1185 = vmatprep.subr.mxu0 0.0
        %1186 = vmatpush1.msra.mxu0 0.0
        %1187 = vmatprep.subr.mxu0 0.0
        %1188 = vmatpush1.msra.mxu0 0.0
        %1189 = vmatprep.subr.mxu0 0.0
        %1190 = vmatpush1.msra.mxu0 0.0
        %1191 = vmatprep.subr.mxu0 0.0
        %1192 = vmatpush1.msra.mxu0 0.0
        %1193 = vmatprep.subr.mxu0 0.0
        %1194 = vmatpush1.msra.mxu0 0.0
        %1195 = vmatprep.subr.mxu0 0.0
        %1196 = vmatpush1.msra.mxu0 0.0
        %1197 = vmatprep.subr.mxu0 0.0
        %1198 = vmatpush1.msra.mxu0 0.0
        %1199 = vmatprep.subr.mxu0 0.0
        %1200 = vmatpush1.msra.mxu0 0.0
        %1201 = vmatprep.subr.mxu0 0.0
        %1202 = vmatpush1.msra.mxu0 0.0
        %1203 = vmatprep.subr.mxu0 0.0
        %1204 = vmatpush1.msra.mxu0 0.0
        %1205 = vmatprep.subr.mxu0 0.0
        %1206 = vmatpush1.msra.mxu0 0.0
        %1207 = vmatprep.subr.mxu0 0.0
        %1208 = vmatpush1.msra.mxu0 0.0
        %1209 = vmatprep.subr.mxu0 0.0
        %1210 = vmatpush1.msra.mxu0 0.0
        %1211 = vmatprep.subr.mxu0 0.0
        %1212 = vmatpush1.msra.mxu0 0.0
        %1213 = vmatprep.subr.mxu0 0.0
        %1214 = vmatpush1.msra.mxu0 0.0
        %1215 = vmatprep.subr.mxu0 0.0
        %1216 = vmatpush1.msra.mxu0 0.0
        %1217 = vmatprep.subr.mxu0 0.0
        %1218 = vmatpush1.msra.mxu0 0.0
        %1219 = vmatprep.subr.mxu0 0.0
        %1220 = vmatpush1.msra.mxu0 0.0
        %1221 = vmatprep.subr.mxu0 0.0
        %1222 = vmatpush1.msra.mxu0 0.0
        %1223 = vmatprep.subr.mxu0 0.0
        %1224 = vmatpush1.msra.mxu0 0.0
        %1225 = vmatprep.subr.mxu0 0.0
        %1226 = vmatpush1.msra.mxu0 0.0
        %1227 = vmatprep.subr.mxu0 0.0
        %1228 = vmatpush1.msra.mxu0 0.0
        %1229 = vmatprep.subr.mxu0 0.0
        %1230 = vmatpush1.msra.mxu0 0.0
        %1231 = vmatprep.mubr.f32.mxu0 0.0
        %1232 = vmatmul.mubr.f32.gmra.mrb[0].mxu0 %v996
        %v1233 = vpop.f32.mrb[0].mxu0
        %v1234 = vadd.f32 %v850, %v1233
        %v1235 = vpop.f32.mrb[0].mxu0
        %v1236 = vadd.f32 %v852, %v1235
        %1237 = vdwg.mxu0
        %1238 = vmatprep.subr.mxu0 %v389
        %1239 = vmatpush1.msra.mxu0 %v388
        %1240 = vmatprep.subr.mxu0 %v1020
        %1241 = vmatpush1.msra.mxu0 %v1017
        %1242 = vmatprep.subr.mxu0 0.0
        %1243 = vmatpush1.msra.mxu0 0.0
        %1244 = vmatprep.subr.mxu0 0.0
        %1245 = vmatpush1.msra.mxu0 0.0
        %1246 = vmatprep.subr.mxu0 0.0
        %1247 = vmatpush1.msra.mxu0 0.0
        %1248 = vmatprep.subr.mxu0 0.0
        %1249 = vmatpush1.msra.mxu0 0.0
        %1250 = vmatprep.subr.mxu0 0.0
        %1251 = vmatpush1.msra.mxu0 0.0
        %1252 = vmatprep.subr.mxu0 0.0
        %1253 = vmatpush1.msra.mxu0 0.0
        %1254 = vmatprep.subr.mxu0 0.0
        %1255 = vmatpush1.msra.mxu0 0.0
        %1256 = vmatprep.subr.mxu0 0.0
        %1257 = vmatpush1.msra.mxu0 0.0
        %1258 = vmatprep.subr.mxu0 0.0
        %1259 = vmatpush1.msra.mxu0 0.0
        %1260 = vmatprep.subr.mxu0 0.0
        %1261 = vmatpush1.msra.mxu0 0.0
        %1262 = vmatprep.subr.mxu0 0.0
        %1263 = vmatpush1.msra.mxu0 0.0
        %1264 = vmatprep.subr.mxu0 0.0
        %1265 = vmatpush1.msra.mxu0 0.0
        %1266 = vmatprep.subr.mxu0 0.0
        %1267 = vmatpush1.msra.mxu0 0.0
        %1268 = vmatprep.subr.mxu0 0.0
        %1269 = vmatpush1.msra.mxu0 0.0
        %1270 = vmatprep.subr.mxu0 0.0
        %1271 = vmatpush1.msra.mxu0 0.0
        %1272 = vmatprep.subr.mxu0 0.0
        %1273 = vmatpush1.msra.mxu0 0.0
        %1274 = vmatprep.subr.mxu0 0.0
        %1275 = vmatpush1.msra.mxu0 0.0
        %1276 = vmatprep.subr.mxu0 0.0
        %1277 = vmatpush1.msra.mxu0 0.0
        %1278 = vmatprep.subr.mxu0 0.0
        %1279 = vmatpush1.msra.mxu0 0.0
        %1280 = vmatprep.subr.mxu0 0.0
        %1281 = vmatpush1.msra.mxu0 0.0
        %1282 = vmatprep.subr.mxu0 0.0
        %1283 = vmatpush1.msra.mxu0 0.0
        %1284 = vmatprep.subr.mxu0 0.0
        %1285 = vmatpush1.msra.mxu0 0.0
        %1286 = vmatprep.subr.mxu0 0.0
        %1287 = vmatpush1.msra.mxu0 0.0
        %1288 = vmatprep.subr.mxu0 0.0
        %1289 = vmatpush1.msra.mxu0 0.0
        %1290 = vmatprep.subr.mxu0 0.0
        %1291 = vmatpush1.msra.mxu0 0.0
        %1292 = vmatprep.subr.mxu0 0.0
        %1293 = vmatpush1.msra.mxu0 0.0
        %1294 = vmatprep.subr.mxu0 0.0
        %1295 = vmatpush1.msra.mxu0 0.0
        %1296 = vmatprep.subr.mxu0 0.0
        %1297 = vmatpush1.msra.mxu0 0.0
        %1298 = vmatprep.subr.mxu0 0.0
        %1299 = vmatpush1.msra.mxu0 0.0
        %1300 = vmatprep.subr.mxu0 0.0
        %1301 = vmatpush1.msra.mxu0 0.0
        %1302 = vmatprep.mubr.f32.mxu0 0.0
        %1303 = vmatmul.mubr.f32.gmra.mrb[0].mxu0 %v996
        %v1304 = vpop.f32.mrb[0].mxu0
        %v1305 = vadd.f32 %v921, %v1304
        %v1306 = vpop.f32.mrb[0].mxu0
        %v1307 = vadd.f32 %v923, %v1306
        %1308 = vdwg.mxu0
        %1309 = vmatprep.subr.mxu0 0.0
        %1310 = vmatpush1.msra.mxu0 %v390
        %1311 = vmatprep.subr.mxu0 0.0
        %1312 = vmatpush1.msra.mxu0 %v1023
        %1313 = vmatprep.subr.mxu0 0.0
        %1314 = vmatpush1.msra.mxu0 0.0
        %1315 = vmatprep.subr.mxu0 0.0
        %1316 = vmatpush1.msra.mxu0 0.0
        %1317 = vmatprep.subr.mxu0 0.0
        %1318 = vmatpush1.msra.mxu0 0.0
        %1319 = vmatprep.subr.mxu0 0.0
        %1320 = vmatpush1.msra.mxu0 0.0
        %1321 = vmatprep.subr.mxu0 0.0
        %1322 = vmatpush1.msra.mxu0 0.0
        %1323 = vmatprep.subr.mxu0 0.0
        %1324 = vmatpush1.msra.mxu0 0.0
        %1325 = vmatprep.subr.mxu0 0.0
        %1326 = vmatpush1.msra.mxu0 0.0
        %1327 = vmatprep.subr.mxu0 0.0
        %1328 = vmatpush1.msra.mxu0 0.0
        %1329 = vmatprep.subr.mxu0 0.0
        %1330 = vmatpush1.msra.mxu0 0.0
        %1331 = vmatprep.subr.mxu0 0.0
        %1332 = vmatpush1.msra.mxu0 0.0
        %1333 = vmatprep.subr.mxu0 0.0
        %1334 = vmatpush1.msra.mxu0 0.0
        %1335 = vmatprep.subr.mxu0 0.0
        %1336 = vmatpush1.msra.mxu0 0.0
        %1337 = vmatprep.subr.mxu0 0.0
        %1338 = vmatpush1.msra.mxu0 0.0
        %1339 = vmatprep.subr.mxu0 0.0
        %1340 = vmatpush1.msra.mxu0 0.0
        %1341 = vmatprep.subr.mxu0 0.0
        %1342 = vmatpush1.msra.mxu0 0.0
        %1343 = vmatprep.subr.mxu0 0.0
        %1344 = vmatpush1.msra.mxu0 0.0
        %1345 = vmatprep.subr.mxu0 0.0
        %1346 = vmatpush1.msra.mxu0 0.0
        %1347 = vmatprep.subr.mxu0 0.0
        %1348 = vmatpush1.msra.mxu0 0.0
        %1349 = vmatprep.subr.mxu0 0.0
        %1350 = vmatpush1.msra.mxu0 0.0
        %1351 = vmatprep.subr.mxu0 0.0
        %1352 = vmatpush1.msra.mxu0 0.0
        %1353 = vmatprep.subr.mxu0 0.0
        %1354 = vmatpush1.msra.mxu0 0.0
        %1355 = vmatprep.subr.mxu0 0.0
        %1356 = vmatpush1.msra.mxu0 0.0
        %1357 = vmatprep.subr.mxu0 0.0
        %1358 = vmatpush1.msra.mxu0 0.0
        %1359 = vmatprep.subr.mxu0 0.0
        %1360 = vmatpush1.msra.mxu0 0.0
        %1361 = vmatprep.subr.mxu0 0.0
        %1362 = vmatpush1.msra.mxu0 0.0
        %1363 = vmatprep.subr.mxu0 0.0
        %1364 = vmatpush1.msra.mxu0 0.0
        %1365 = vmatprep.subr.mxu0 0.0
        %1366 = vmatpush1.msra.mxu0 0.0
        %1367 = vmatprep.subr.mxu0 0.0
        %1368 = vmatpush1.msra.mxu0 0.0
        %1369 = vmatprep.subr.mxu0 0.0
        %1370 = vmatpush1.msra.mxu0 0.0
        %1371 = vmatprep.subr.mxu0 0.0
        %1372 = vmatpush1.msra.mxu0 0.0
        %1373 = vmatprep.mubr.f32.mxu0 0.0
        %1374 = vmatmul.mubr.f32.gmra.mrb[0].mxu0 %v996
        %v1375 = vpop.f32.mrb[0].mxu0
        %v1376 = vadd.f32 %v992, %v1375
        %v1377 = vpop.f32.mrb[0].mxu0
        %1378 = vdwg.mxu0
        %v1379 = vld [vmem:[%s200] sm:$0xff]
        %v1380 = vld [vmem:[%s200 + $0x8] sm:$0xff]
        %v1381 = vld [vmem:[%s200 + $0x10] sm:$0xff]
        %v1382 = vld [vmem:[%s200 + $0x18] sm:$0xff]
        %v1383 = vld [vmem:[%s200 + $0x20] sm:$0xff]
        %v1389 = vcombine.high %v1379, %v1379
        %v1390 = vcombine.high %v1380, %v1380
        %v1391 = vcombine.high %v1381, %v1381
        %v1392 = vcombine.high %v1382, %v1382
        %v1393 = vcombine.high %v1383, %v1383
        %1394 = vrot.lane.b32.xlu0 %v1379, 60
        %v1395 = vpop.permute.xlu0 %1394
        %1396 = vrot.lane.b32.xlu0 %v1389, 60
        %v1397 = vpop.permute.xlu0 %1396
        %1398 = vrot.lane.b32.xlu0 %v1380, 60
        %v1399 = vpop.permute.xlu0 %1398
        %1400 = vrot.lane.b32.xlu0 %v1390, 60
        %v1401 = vpop.permute.xlu0 %1400
        %1402 = vrot.lane.b32.xlu0 %v1381, 60
        %v1403 = vpop.permute.xlu0 %1402
        %1404 = vrot.lane.b32.xlu0 %v1391, 60
        %v1405 = vpop.permute.xlu0 %1404
        %1406 = vrot.lane.b32.xlu0 %v1382, 60
        %v1407 = vpop.permute.xlu0 %1406
        %1408 = vrot.lane.b32.xlu0 %v1392, 60
        %v1409 = vpop.permute.xlu0 %1408
        %1410 = vrot.lane.b32.xlu0 %v1383, 60
        %v1411 = vpop.permute.xlu0 %1410
        %1412 = vrot.lane.b32.xlu0 %v1393, 60
        %v1413 = vpop.permute.xlu0 %1412
        %vm1414 = vcmask 490496
        %v1415 = vsel %vm1414, %v1395, %v1397
        %v1416 = vsel %vm1414, %v1397, %v1399
        %v1417 = vsel %vm1414, %v1399, %v1401
        %v1418 = vsel %vm1414, %v1401, %v1403
        %v1419 = vsel %vm1414, %v1403, %v1405
        %v1420 = vsel %vm1414, %v1405, %v1407
        %v1421 = vsel %vm1414, %v1407, %v1409
        %v1422 = vsel %vm1414, %v1409, %v1411
        %v1423 = vsel %vm1414, %v1411, %v1413
        %1433 = vst [vmem:[#allocation2] sm:$0xf] %v1415
        %1434 = vst [vmem:[#allocation2 + $0x8] sm:$0xf] %v1416
        %1435 = vst [vmem:[#allocation2 + $0x10] sm:$0xf] %v1417
        %1436 = vst [vmem:[#allocation2 + $0x18] sm:$0xf] %v1418
        %1437 = vst [vmem:[#allocation2 + $0x20] sm:$0xf] %v1419
        %1438 = vst [vmem:[#allocation2 + $0x28] sm:$0xf] %v1420
        %1439 = vst [vmem:[#allocation2 + $0x30] sm:$0xf] %v1421
        %1440 = vst [vmem:[#allocation2 + $0x38] sm:$0xf] %v1422
        %1441 = vst [vmem:[#allocation2 + $0x40] sm:$0xf] %v1423
        %v1442 = vld [vmem:[%s200] sm:$0xff]
        %v1443 = vld [vmem:[%s200 + $0x8] sm:$0xff]
        %v1444 = vld [vmem:[%s200 + $0x10] sm:$0xff]
        %v1445 = vld [vmem:[%s200 + $0x18] sm:$0xff]
        %v1446 = vld [vmem:[%s200 + $0x20] sm:$0xff]
        %v1452 = vcombine.low %v1442, %v1442
        %v1453 = vcombine.low %v1443, %v1443
        %v1454 = vcombine.low %v1444, %v1444
        %v1455 = vcombine.low %v1445, %v1445
        %v1456 = vcombine.low %v1446, %v1446
        %1457 = vrot.lane.b32.xlu0 %v1452, 59
        %v1458 = vpop.permute.xlu0 %1457
        %1459 = vrot.lane.b32.xlu0 %v1442, 59
        %v1460 = vpop.permute.xlu0 %1459
        %1461 = vrot.lane.b32.xlu0 %v1453, 59
        %v1462 = vpop.permute.xlu0 %1461
        %1463 = vrot.lane.b32.xlu0 %v1443, 59
        %v1464 = vpop.permute.xlu0 %1463
        %1465 = vrot.lane.b32.xlu0 %v1454, 59
        %v1466 = vpop.permute.xlu0 %1465
        %1467 = vrot.lane.b32.xlu0 %v1444, 59
        %v1468 = vpop.permute.xlu0 %1467
        %1469 = vrot.lane.b32.xlu0 %v1455, 59
        %v1470 = vpop.permute.xlu0 %1469
        %1471 = vrot.lane.b32.xlu0 %v1445, 59
        %v1472 = vpop.permute.xlu0 %1471
        %1473 = vrot.lane.b32.xlu0 %v1456, 59
        %v1474 = vpop.permute.xlu0 %1473
        %1475 = vrot.lane.b32.xlu0 %v1446, 59
        %v1476 = vpop.permute.xlu0 %1475
        %vm1477 = vcmask 482304
        %v1478 = vsel %vm1477, %v1458, %v1460
        %v1479 = vsel %vm1477, %v1460, %v1462
        %v1480 = vsel %vm1477, %v1462, %v1464
        %v1481 = vsel %vm1477, %v1464, %v1466
        %v1482 = vsel %vm1477, %v1466, %v1468
        %v1483 = vsel %vm1477, %v1468, %v1470
        %v1484 = vsel %vm1477, %v1470, %v1472
        %v1485 = vsel %vm1477, %v1472, %v1474
        %v1486 = vsel %vm1477, %v1474, %v1476
        %1496 = vst [vmem:[#allocation2] sm:$0xf0] %v1478
        %1497 = vst [vmem:[#allocation2 + $0x8] sm:$0xf0] %v1479
        %1498 = vst [vmem:[#allocation2 + $0x10] sm:$0xf0] %v1480
        %1499 = vst [vmem:[#allocation2 + $0x18] sm:$0xf0] %v1481
        %1500 = vst [vmem:[#allocation2 + $0x20] sm:$0xf0] %v1482
        %1501 = vst [vmem:[#allocation2 + $0x28] sm:$0xf0] %v1483
        %1502 = vst [vmem:[#allocation2 + $0x30] sm:$0xf0] %v1484
        %1503 = vst [vmem:[#allocation2 + $0x38] sm:$0xf0] %v1485
        %1504 = vst [vmem:[#allocation2 + $0x40] sm:$0xf0] %v1486
        %v1505 = vld [vmem:[%s200] sm:$0xff]
        %v1506 = vld [vmem:[%s200 + $0x8] sm:$0xff]
        %v1507 = vld [vmem:[%s200 + $0x10] sm:$0xff]
        %v1508 = vld [vmem:[%s200 + $0x18] sm:$0xff]
        %v1509 = vld [vmem:[%s200 + $0x20] sm:$0xff]
        %v1515 = vcombine.high %v1505, %v1505
        %v1516 = vcombine.high %v1506, %v1506
        %v1517 = vcombine.high %v1507, %v1507
        %v1518 = vcombine.high %v1508, %v1508
        %v1519 = vcombine.high %v1509, %v1509
        %1520 = vrot.lane.b32.xlu0 %v1505, 58
        %v1521 = vpop.permute.xlu0 %1520
        %1522 = vrot.lane.b32.xlu0 %v1515, 58
        %v1523 = vpop.permute.xlu0 %1522
        %1524 = vrot.lane.b32.xlu0 %v1506, 58
        %v1525 = vpop.permute.xlu0 %1524
        %1526 = vrot.lane.b32.xlu0 %v1516, 58
        %v1527 = vpop.permute.xlu0 %1526
        %1528 = vrot.lane.b32.xlu0 %v1507, 58
        %v1529 = vpop.permute.xlu0 %1528
        %1530 = vrot.lane.b32.xlu0 %v1517, 58
        %v1531 = vpop.permute.xlu0 %1530
        %1532 = vrot.lane.b32.xlu0 %v1508, 58
        %v1533 = vpop.permute.xlu0 %1532
        %1534 = vrot.lane.b32.xlu0 %v1518, 58
        %v1535 = vpop.permute.xlu0 %1534
        %1536 = vrot.lane.b32.xlu0 %v1509, 58
        %v1537 = vpop.permute.xlu0 %1536
        %1538 = vrot.lane.b32.xlu0 %v1519, 58
        %v1539 = vpop.permute.xlu0 %1538
        %vm1540 = vcmask 474112
        %v1541 = vsel %vm1540, %v1521, %v1523
        %v1542 = vsel %vm1540, %v1523, %v1525
        %v1543 = vsel %vm1540, %v1525, %v1527
        %v1544 = vsel %vm1540, %v1527, %v1529
        %v1545 = vsel %vm1540, %v1529, %v1531
        %v1546 = vsel %vm1540, %v1531, %v1533
        %v1547 = vsel %vm1540, %v1533, %v1535
        %v1548 = vsel %vm1540, %v1535, %v1537
        %v1549 = vsel %vm1540, %v1537, %v1539
        %1559 = vst [vmem:[#allocation2 + $0x48] sm:$0xf] %v1541
        %1560 = vst [vmem:[#allocation2 + $0x50] sm:$0xf] %v1542
        %1561 = vst [vmem:[#allocation2 + $0x58] sm:$0xf] %v1543
        %1562 = vst [vmem:[#allocation2 + $0x60] sm:$0xf] %v1544
        %1563 = vst [vmem:[#allocation2 + $0x68] sm:$0xf] %v1545
        %1564 = vst [vmem:[#allocation2 + $0x70] sm:$0xf] %v1546
        %1565 = vst [vmem:[#allocation2 + $0x78] sm:$0xf] %v1547
        %1566 = vst [vmem:[#allocation2 + $0x80] sm:$0xf] %v1548
        %1567 = vst [vmem:[#allocation2 + $0x88] sm:$0xf] %v1549
        %s1568 = scalar_lea.vmem [#allocation6], 16
        %v1569 = vld [vmem:[%s1568] sm:$0xff]
        %v1570 = vld [vmem:[#allocation2] sm:$0xff]
        %v1571 = vld [vmem:[#allocation2 + $0x8] sm:$0xff]
        %v1572 = vld [vmem:[#allocation2 + $0x10] sm:$0xff]
        %v1573 = vld [vmem:[#allocation2 + $0x18] sm:$0xff]
        %v1574 = vld [vmem:[#allocation2 + $0x20] sm:$0xff]
        %v1575 = vld [vmem:[#allocation2 + $0x28] sm:$0xff]
        %v1576 = vld [vmem:[#allocation2 + $0x30] sm:$0xff]
        %v1577 = vld [vmem:[#allocation2 + $0x38] sm:$0xff]
        %v1578 = vld [vmem:[#allocation2 + $0x40] sm:$0xff]
        %v1579 = vld [vmem:[#allocation2 + $0x48] sm:$0xf]
        %v1580 = vld [vmem:[#allocation2 + $0x50] sm:$0xf]
        %v1581 = vld [vmem:[#allocation2 + $0x58] sm:$0xf]
        %v1582 = vld [vmem:[#allocation2 + $0x60] sm:$0xf]
        %v1583 = vld [vmem:[#allocation2 + $0x68] sm:$0xf]
        %v1584 = vld [vmem:[#allocation2 + $0x70] sm:$0xf]
        %v1585 = vld [vmem:[#allocation2 + $0x78] sm:$0xf]
        %v1586 = vld [vmem:[#allocation2 + $0x80] sm:$0xf]
        %v1587 = vld [vmem:[#allocation2 + $0x88] sm:$0xf]
        %v1589 = vsel %vm609, %v1569, 0
        %v1592 = vsel %vm613, %v1579, 0
        %v1595 = vsel %vm613, %v1580, 0
        %v1598 = vsel %vm613, %v1581, 0
        %v1601 = vsel %vm613, %v1582, 0
        %v1604 = vsel %vm613, %v1583, 0
        %v1607 = vsel %vm613, %v1584, 0
        %v1610 = vsel %vm613, %v1585, 0
        %v1613 = vsel %vm613, %v1586, 0
        %v1616 = vsel %vm613, %v1587, 0
        %1618 = vmatprep.subr.mxu0 %v1571
        %1619 = vmatpush1.msra.mxu0 %v1570
        %1620 = vmatprep.subr.mxu0 %v1595
        %1621 = vmatpush1.msra.mxu0 %v1592
        %1622 = vmatprep.subr.mxu0 0.0
        %1623 = vmatpush1.msra.mxu0 0.0
        %1624 = vmatprep.subr.mxu0 0.0
        %1625 = vmatpush1.msra.mxu0 0.0
        %1626 = vmatprep.subr.mxu0 0.0
        %1627 = vmatpush1.msra.mxu0 0.0
        %1628 = vmatprep.subr.mxu0 0.0
        %1629 = vmatpush1.msra.mxu0 0.0
        %1630 = vmatprep.subr.mxu0 0.0
        %1631 = vmatpush1.msra.mxu0 0.0
        %1632 = vmatprep.subr.mxu0 0.0
        %1633 = vmatpush1.msra.mxu0 0.0
        %1634 = vmatprep.subr.mxu0 0.0
        %1635 = vmatpush1.msra.mxu0 0.0
        %1636 = vmatprep.subr.mxu0 0.0
        %1637 = vmatpush1.msra.mxu0 0.0
        %1638 = vmatprep.subr.mxu0 0.0
        %1639 = vmatpush1.msra.mxu0 0.0
        %1640 = vmatprep.subr.mxu0 0.0
        %1641 = vmatpush1.msra.mxu0 0.0
        %1642 = vmatprep.subr.mxu0 0.0
        %1643 = vmatpush1.msra.mxu0 0.0
        %1644 = vmatprep.subr.mxu0 0.0
        %1645 = vmatpush1.msra.mxu0 0.0
        %1646 = vmatprep.subr.mxu0 0.0
        %1647 = vmatpush1.msra.mxu0 0.0
        %1648 = vmatprep.subr.mxu0 0.0
        %1649 = vmatpush1.msra.mxu0 0.0
        %1650 = vmatprep.subr.mxu0 0.0
        %1651 = vmatpush1.msra.mxu0 0.0
        %1652 = vmatprep.subr.mxu0 0.0
        %1653 = vmatpush1.msra.mxu0 0.0
        %1654 = vmatprep.subr.mxu0 0.0
        %1655 = vmatpush1.msra.mxu0 0.0
        %1656 = vmatprep.subr.mxu0 0.0
        %1657 = vmatpush1.msra.mxu0 0.0
        %1658 = vmatprep.subr.mxu0 0.0
        %1659 = vmatpush1.msra.mxu0 0.0
        %1660 = vmatprep.subr.mxu0 0.0
        %1661 = vmatpush1.msra.mxu0 0.0
        %1662 = vmatprep.subr.mxu0 0.0
        %1663 = vmatpush1.msra.mxu0 0.0
        %1664 = vmatprep.subr.mxu0 0.0
        %1665 = vmatpush1.msra.mxu0 0.0
        %1666 = vmatprep.subr.mxu0 0.0
        %1667 = vmatpush1.msra.mxu0 0.0
        %1668 = vmatprep.subr.mxu0 0.0
        %1669 = vmatpush1.msra.mxu0 0.0
        %1670 = vmatprep.subr.mxu0 0.0
        %1671 = vmatpush1.msra.mxu0 0.0
        %1672 = vmatprep.subr.mxu0 0.0
        %1673 = vmatpush1.msra.mxu0 0.0
        %1674 = vmatprep.subr.mxu0 0.0
        %1675 = vmatpush1.msra.mxu0 0.0
        %1676 = vmatprep.subr.mxu0 0.0
        %1677 = vmatpush1.msra.mxu0 0.0
        %1678 = vmatprep.subr.mxu0 0.0
        %1679 = vmatpush1.msra.mxu0 0.0
        %1680 = vmatprep.subr.mxu0 0.0
        %1681 = vmatpush1.msra.mxu0 0.0
        %1682 = vmatprep.mubr.f32.mxu0 0.0
        %1683 = vmatmul.mubr.f32.gmra.mrb[0].mxu0 %v1589
        %v1684 = vpop.f32.mrb[0].mxu0
        %v1685 = vadd.f32 0.0, %v1684
        %v1686 = vpop.f32.mrb[0].mxu0
        %v1687 = vadd.f32 0.0, %v1686
        %1688 = vdwg.mxu0
        %1689 = vmatprep.subr.mxu0 %v1573
        %1690 = vmatpush1.msra.mxu0 %v1572
        %1691 = vmatprep.subr.mxu0 %v1601
        %1692 = vmatpush1.msra.mxu0 %v1598
        %1693 = vmatprep.subr.mxu0 0.0
        %1694 = vmatpush1.msra.mxu0 0.0
        %1695 = vmatprep.subr.mxu0 0.0
        %1696 = vmatpush1.msra.mxu0 0.0
        %1697 = vmatprep.subr.mxu0 0.0
        %1698 = vmatpush1.msra.mxu0 0.0
        %1699 = vmatprep.subr.mxu0 0.0
        %1700 = vmatpush1.msra.mxu0 0.0
        %1701 = vmatprep.subr.mxu0 0.0
        %1702 = vmatpush1.msra.mxu0 0.0
        %1703 = vmatprep.subr.mxu0 0.0
        %1704 = vmatpush1.msra.mxu0 0.0
        %1705 = vmatprep.subr.mxu0 0.0
        %1706 = vmatpush1.msra.mxu0 0.0
        %1707 = vmatprep.subr.mxu0 0.0
        %1708 = vmatpush1.msra.mxu0 0.0
        %1709 = vmatprep.subr.mxu0 0.0
        %1710 = vmatpush1.msra.mxu0 0.0
        %1711 = vmatprep.subr.mxu0 0.0
        %1712 = vmatpush1.msra.mxu0 0.0
        %1713 = vmatprep.subr.mxu0 0.0
        %1714 = vmatpush1.msra.mxu0 0.0
        %1715 = vmatprep.subr.mxu0 0.0
        %1716 = vmatpush1.msra.mxu0 0.0
        %1717 = vmatprep.subr.mxu0 0.0
        %1718 = vmatpush1.msra.mxu0 0.0
        %1719 = vmatprep.subr.mxu0 0.0
        %1720 = vmatpush1.msra.mxu0 0.0
        %1721 = vmatprep.subr.mxu0 0.0
        %1722 = vmatpush1.msra.mxu0 0.0
        %1723 = vmatprep.subr.mxu0 0.0
        %1724 = vmatpush1.msra.mxu0 0.0
        %1725 = vmatprep.subr.mxu0 0.0
        %1726 = vmatpush1.msra.mxu0 0.0
        %1727 = vmatprep.subr.mxu0 0.0
        %1728 = vmatpush1.msra.mxu0 0.0
        %1729 = vmatprep.subr.mxu0 0.0
        %1730 = vmatpush1.msra.mxu0 0.0
        %1731 = vmatprep.subr.mxu0 0.0
        %1732 = vmatpush1.msra.mxu0 0.0
        %1733 = vmatprep.subr.mxu0 0.0
        %1734 = vmatpush1.msra.mxu0 0.0
        %1735 = vmatprep.subr.mxu0 0.0
        %1736 = vmatpush1.msra.mxu0 0.0
        %1737 = vmatprep.subr.mxu0 0.0
        %1738 = vmatpush1.msra.mxu0 0.0
        %1739 = vmatprep.subr.mxu0 0.0
        %1740 = vmatpush1.msra.mxu0 0.0
        %1741 = vmatprep.subr.mxu0 0.0
        %1742 = vmatpush1.msra.mxu0 0.0
        %1743 = vmatprep.subr.mxu0 0.0
        %1744 = vmatpush1.msra.mxu0 0.0
        %1745 = vmatprep.subr.mxu0 0.0
        %1746 = vmatpush1.msra.mxu0 0.0
        %1747 = vmatprep.subr.mxu0 0.0
        %1748 = vmatpush1.msra.mxu0 0.0
        %1749 = vmatprep.subr.mxu0 0.0
        %1750 = vmatpush1.msra.mxu0 0.0
        %1751 = vmatprep.subr.mxu0 0.0
        %1752 = vmatpush1.msra.mxu0 0.0
        %1753 = vmatprep.mubr.f32.mxu0 0.0
        %1754 = vmatmul.mubr.f32.gmra.mrb[0].mxu0 %v1589
        %v1755 = vpop.f32.mrb[0].mxu0
        %v1756 = vadd.f32 0.0, %v1755
        %v1757 = vpop.f32.mrb[0].mxu0
        %v1758 = vadd.f32 0.0, %v1757
        %1759 = vdwg.mxu0
        %1760 = vmatprep.subr.mxu0 %v1575
        %1761 = vmatpush1.msra.mxu0 %v1574
        %1762 = vmatprep.subr.mxu0 %v1607
        %1763 = vmatpush1.msra.mxu0 %v1604
        %1764 = vmatprep.subr.mxu0 0.0
        %1765 = vmatpush1.msra.mxu0 0.0
        %1766 = vmatprep.subr.mxu0 0.0
        %1767 = vmatpush1.msra.mxu0 0.0
        %1768 = vmatprep.subr.mxu0 0.0
        %1769 = vmatpush1.msra.mxu0 0.0
        %1770 = vmatprep.subr.mxu0 0.0
        %1771 = vmatpush1.msra.mxu0 0.0
        %1772 = vmatprep.subr.mxu0 0.0
        %1773 = vmatpush1.msra.mxu0 0.0
        %1774 = vmatprep.subr.mxu0 0.0
        %1775 = vmatpush1.msra.mxu0 0.0
        %1776 = vmatprep.subr.mxu0 0.0
        %1777 = vmatpush1.msra.mxu0 0.0
        %1778 = vmatprep.subr.mxu0 0.0
        %1779 = vmatpush1.msra.mxu0 0.0
        %1780 = vmatprep.subr.mxu0 0.0
        %1781 = vmatpush1.msra.mxu0 0.0
        %1782 = vmatprep.subr.mxu0 0.0
        %1783 = vmatpush1.msra.mxu0 0.0
        %1784 = vmatprep.subr.mxu0 0.0
        %1785 = vmatpush1.msra.mxu0 0.0
        %1786 = vmatprep.subr.mxu0 0.0
        %1787 = vmatpush1.msra.mxu0 0.0
        %1788 = vmatprep.subr.mxu0 0.0
        %1789 = vmatpush1.msra.mxu0 0.0
        %1790 = vmatprep.subr.mxu0 0.0
        %1791 = vmatpush1.msra.mxu0 0.0
        %1792 = vmatprep.subr.mxu0 0.0
        %1793 = vmatpush1.msra.mxu0 0.0
        %1794 = vmatprep.subr.mxu0 0.0
        %1795 = vmatpush1.msra.mxu0 0.0
        %1796 = vmatprep.subr.mxu0 0.0
        %1797 = vmatpush1.msra.mxu0 0.0
        %1798 = vmatprep.subr.mxu0 0.0
        %1799 = vmatpush1.msra.mxu0 0.0
        %1800 = vmatprep.subr.mxu0 0.0
        %1801 = vmatpush1.msra.mxu0 0.0
        %1802 = vmatprep.subr.mxu0 0.0
        %1803 = vmatpush1.msra.mxu0 0.0
        %1804 = vmatprep.subr.mxu0 0.0
        %1805 = vmatpush1.msra.mxu0 0.0
        %1806 = vmatprep.subr.mxu0 0.0
        %1807 = vmatpush1.msra.mxu0 0.0
        %1808 = vmatprep.subr.mxu0 0.0
        %1809 = vmatpush1.msra.mxu0 0.0
        %1810 = vmatprep.subr.mxu0 0.0
        %1811 = vmatpush1.msra.mxu0 0.0
        %1812 = vmatprep.subr.mxu0 0.0
        %1813 = vmatpush1.msra.mxu0 0.0
        %1814 = vmatprep.subr.mxu0 0.0
        %1815 = vmatpush1.msra.mxu0 0.0
        %1816 = vmatprep.subr.mxu0 0.0
        %1817 = vmatpush1.msra.mxu0 0.0
        %1818 = vmatprep.subr.mxu0 0.0
        %1819 = vmatpush1.msra.mxu0 0.0
        %1820 = vmatprep.subr.mxu0 0.0
        %1821 = vmatpush1.msra.mxu0 0.0
        %1822 = vmatprep.subr.mxu0 0.0
        %1823 = vmatpush1.msra.mxu0 0.0
        %1824 = vmatprep.mubr.f32.mxu0 0.0
        %1825 = vmatmul.mubr.f32.gmra.mrb[0].mxu0 %v1589
        %v1826 = vpop.f32.mrb[0].mxu0
        %v1827 = vadd.f32 0.0, %v1826
        %v1828 = vpop.f32.mrb[0].mxu0
        %v1829 = vadd.f32 0.0, %v1828
        %1830 = vdwg.mxu0
        %1831 = vmatprep.subr.mxu0 %v1577
        %1832 = vmatpush1.msra.mxu0 %v1576
        %1833 = vmatprep.subr.mxu0 %v1613
        %1834 = vmatpush1.msra.mxu0 %v1610
        %1835 = vmatprep.subr.mxu0 0.0
        %1836 = vmatpush1.msra.mxu0 0.0
        %1837 = vmatprep.subr.mxu0 0.0
        %1838 = vmatpush1.msra.mxu0 0.0
        %1839 = vmatprep.subr.mxu0 0.0
        %1840 = vmatpush1.msra.mxu0 0.0
        %1841 = vmatprep.subr.mxu0 0.0
        %1842 = vmatpush1.msra.mxu0 0.0
        %1843 = vmatprep.subr.mxu0 0.0
        %1844 = vmatpush1.msra.mxu0 0.0
        %1845 = vmatprep.subr.mxu0 0.0
        %1846 = vmatpush1.msra.mxu0 0.0
        %1847 = vmatprep.subr.mxu0 0.0
        %1848 = vmatpush1.msra.mxu0 0.0
        %1849 = vmatprep.subr.mxu0 0.0
        %1850 = vmatpush1.msra.mxu0 0.0
        %1851 = vmatprep.subr.mxu0 0.0
        %1852 = vmatpush1.msra.mxu0 0.0
        %1853 = vmatprep.subr.mxu0 0.0
        %1854 = vmatpush1.msra.mxu0 0.0
        %1855 = vmatprep.subr.mxu0 0.0
        %1856 = vmatpush1.msra.mxu0 0.0
        %1857 = vmatprep.subr.mxu0 0.0
        %1858 = vmatpush1.msra.mxu0 0.0
        %1859 = vmatprep.subr.mxu0 0.0
        %1860 = vmatpush1.msra.mxu0 0.0
        %1861 = vmatprep.subr.mxu0 0.0
        %1862 = vmatpush1.msra.mxu0 0.0
        %1863 = vmatprep.subr.mxu0 0.0
        %1864 = vmatpush1.msra.mxu0 0.0
        %1865 = vmatprep.subr.mxu0 0.0
        %1866 = vmatpush1.msra.mxu0 0.0
        %1867 = vmatprep.subr.mxu0 0.0
        %1868 = vmatpush1.msra.mxu0 0.0
        %1869 = vmatprep.subr.mxu0 0.0
        %1870 = vmatpush1.msra.mxu0 0.0
        %1871 = vmatprep.subr.mxu0 0.0
        %1872 = vmatpush1.msra.mxu0 0.0
        %1873 = vmatprep.subr.mxu0 0.0
        %1874 = vmatpush1.msra.mxu0 0.0
        %1875 = vmatprep.subr.mxu0 0.0
        %1876 = vmatpush1.msra.mxu0 0.0
        %1877 = vmatprep.subr.mxu0 0.0
        %1878 = vmatpush1.msra.mxu0 0.0
        %1879 = vmatprep.subr.mxu0 0.0
        %1880 = vmatpush1.msra.mxu0 0.0
        %1881 = vmatprep.subr.mxu0 0.0
        %1882 = vmatpush1.msra.mxu0 0.0
        %1883 = vmatprep.subr.mxu0 0.0
        %1884 = vmatpush1.msra.mxu0 0.0
        %1885 = vmatprep.subr.mxu0 0.0
        %1886 = vmatpush1.msra.mxu0 0.0
        %1887 = vmatprep.subr.mxu0 0.0
        %1888 = vmatpush1.msra.mxu0 0.0
        %1889 = vmatprep.subr.mxu0 0.0
        %1890 = vmatpush1.msra.mxu0 0.0
        %1891 = vmatprep.subr.mxu0 0.0
        %1892 = vmatpush1.msra.mxu0 0.0
        %1893 = vmatprep.subr.mxu0 0.0
        %1894 = vmatpush1.msra.mxu0 0.0
        %1895 = vmatprep.mubr.f32.mxu0 0.0
        %1896 = vmatmul.mubr.f32.gmra.mrb[0].mxu0 %v1589
        %v1897 = vpop.f32.mrb[0].mxu0
        %v1898 = vadd.f32 0.0, %v1897
        %v1899 = vpop.f32.mrb[0].mxu0
        %v1900 = vadd.f32 0.0, %v1899
        %1901 = vdwg.mxu0
        %1902 = vmatprep.subr.mxu0 0.0
        %1903 = vmatpush1.msra.mxu0 %v1578
        %1904 = vmatprep.subr.mxu0 0.0
        %1905 = vmatpush1.msra.mxu0 %v1616
        %1906 = vmatprep.subr.mxu0 0.0
        %1907 = vmatpush1.msra.mxu0 0.0
        %1908 = vmatprep.subr.mxu0 0.0
        %1909 = vmatpush1.msra.mxu0 0.0
        %1910 = vmatprep.subr.mxu0 0.0
        %1911 = vmatpush1.msra.mxu0 0.0
        %1912 = vmatprep.subr.mxu0 0.0
        %1913 = vmatpush1.msra.mxu0 0.0
        %1914 = vmatprep.subr.mxu0 0.0
        %1915 = vmatpush1.msra.mxu0 0.0
        %1916 = vmatprep.subr.mxu0 0.0
        %1917 = vmatpush1.msra.mxu0 0.0
        %1918 = vmatprep.subr.mxu0 0.0
        %1919 = vmatpush1.msra.mxu0 0.0
        %1920 = vmatprep.subr.mxu0 0.0
        %1921 = vmatpush1.msra.mxu0 0.0
        %1922 = vmatprep.subr.mxu0 0.0
        %1923 = vmatpush1.msra.mxu0 0.0
        %1924 = vmatprep.subr.mxu0 0.0
        %1925 = vmatpush1.msra.mxu0 0.0
        %1926 = vmatprep.subr.mxu0 0.0
        %1927 = vmatpush1.msra.mxu0 0.0
        %1928 = vmatprep.subr.mxu0 0.0
        %1929 = vmatpush1.msra.mxu0 0.0
        %1930 = vmatprep.subr.mxu0 0.0
        %1931 = vmatpush1.msra.mxu0 0.0
        %1932 = vmatprep.subr.mxu0 0.0
        %1933 = vmatpush1.msra.mxu0 0.0
        %1934 = vmatprep.subr.mxu0 0.0
        %1935 = vmatpush1.msra.mxu0 0.0
        %1936 = vmatprep.subr.mxu0 0.0
        %1937 = vmatpush1.msra.mxu0 0.0
        %1938 = vmatprep.subr.mxu0 0.0
        %1939 = vmatpush1.msra.mxu0 0.0
        %1940 = vmatprep.subr.mxu0 0.0
        %1941 = vmatpush1.msra.mxu0 0.0
        %1942 = vmatprep.subr.mxu0 0.0
        %1943 = vmatpush1.msra.mxu0 0.0
        %1944 = vmatprep.subr.mxu0 0.0
        %1945 = vmatpush1.msra.mxu0 0.0
        %1946 = vmatprep.subr.mxu0 0.0
        %1947 = vmatpush1.msra.mxu0 0.0
        %1948 = vmatprep.subr.mxu0 0.0
        %1949 = vmatpush1.msra.mxu0 0.0
        %1950 = vmatprep.subr.mxu0 0.0
        %1951 = vmatpush1.msra.mxu0 0.0
        %1952 = vmatprep.subr.mxu0 0.0
        %1953 = vmatpush1.msra.mxu0 0.0
        %1954 = vmatprep.subr.mxu0 0.0
        %1955 = vmatpush1.msra.mxu0 0.0
        %1956 = vmatprep.subr.mxu0 0.0
        %1957 = vmatpush1.msra.mxu0 0.0
        %1958 = vmatprep.subr.mxu0 0.0
        %1959 = vmatpush1.msra.mxu0 0.0
        %1960 = vmatprep.subr.mxu0 0.0
        %1961 = vmatpush1.msra.mxu0 0.0
        %1962 = vmatprep.subr.mxu0 0.0
        %1963 = vmatpush1.msra.mxu0 0.0
        %1964 = vmatprep.subr.mxu0 0.0
        %1965 = vmatpush1.msra.mxu0 0.0
        %1966 = vmatprep.mubr.f32.mxu0 0.0
        %1967 = vmatmul.mubr.f32.gmra.mrb[0].mxu0 %v1589
        %v1968 = vpop.f32.mrb[0].mxu0
        %v1969 = vadd.f32 0.0, %v1968
        %v1970 = vpop.f32.mrb[0].mxu0
        %1971 = vdwg.mxu0
        %v1972 = vadd.f32 %v1092, %v1685
        %v1973 = vadd.f32 %v1094, %v1687
        %v1974 = vadd.f32 %v1163, %v1756
        %v1975 = vadd.f32 %v1165, %v1758
        %v1976 = vadd.f32 %v1234, %v1827
        %v1977 = vadd.f32 %v1236, %v1829
        %v1978 = vadd.f32 %v1305, %v1898
        %v1979 = vadd.f32 %v1307, %v1900
        %v1980 = vadd.f32 %v1376, %v1969
        %v1981 = vlaneseq
        %v1982 = vand.u32 %v1981, 127
        %v1983 = vadd.s32 %v1982, 128
        %v1984 = vadd.s32 %v1982, 256
        %v1985 = vadd.s32 %v1982, 384
        %v1986 = vadd.s32 %v1982, 512
        %v1987 = vadd.s32 %v1982, 640
        %v1988 = vadd.s32 %v1982, 768
        %v1989 = vadd.s32 %v1982, 896
        %v1990 = vadd.s32 %v1982, 1024
        %v1991 = vcvt.s32.f32 %v1982
        %v1992 = vcvt.s32.f32 %v1983
        %v1993 = vcvt.s32.f32 %v1984
        %v1994 = vcvt.s32.f32 %v1985
        %v1995 = vcvt.s32.f32 %v1986
        %v1996 = vcvt.s32.f32 %v1987
        %v1997 = vcvt.s32.f32 %v1988
        %v1998 = vcvt.s32.f32 %v1989
        %v1999 = vcvt.s32.f32 %v1990
        %v2000 = vadd.f32 %v1991, 0.5
        %v2001 = vadd.f32 %v1992, 0.5
        %v2002 = vadd.f32 %v1993, 0.5
        %v2003 = vadd.f32 %v1994, 0.5
        %v2004 = vadd.f32 %v1995, 0.5
        %v2005 = vadd.f32 %v1996, 0.5
        %v2006 = vadd.f32 %v1997, 0.5
        %v2007 = vadd.f32 %v1998, 0.5
        %v2008 = vadd.f32 %v1999, 0.5
        %v2009 = vmul.f32 %v2000, 0.029411765
        %v2010 = vmul.f32 %v2001, 0.029411765
        %v2011 = vmul.f32 %v2002, 0.029411765
        %v2012 = vmul.f32 %v2003, 0.029411765
        %v2013 = vmul.f32 %v2004, 0.029411765
        %v2014 = vmul.f32 %v2005, 0.029411765
        %v2015 = vmul.f32 %v2006, 0.029411765
        %v2016 = vmul.f32 %v2007, 0.029411765
        %v2017 = vmul.f32 %v2008, 0.029411765
        %v2018 = vfloor.f32 %v2009
        %v2019 = vfloor.f32 %v2010
        %v2020 = vfloor.f32 %v2011
        %v2021 = vfloor.f32 %v2012
        %v2022 = vfloor.f32 %v2013
        %v2023 = vfloor.f32 %v2014
        %v2024 = vfloor.f32 %v2015
        %v2025 = vfloor.f32 %v2016
        %v2026 = vfloor.f32 %v2017
        %v2027 = vmul.f32 %v2018, 34.0
        %v2028 = vmul.f32 %v2019, 34.0
        %v2029 = vmul.f32 %v2020, 34.0
        %v2030 = vmul.f32 %v2021, 34.0
        %v2031 = vmul.f32 %v2022, 34.0
        %v2032 = vmul.f32 %v2023, 34.0
        %v2033 = vmul.f32 %v2024, 34.0
        %v2034 = vmul.f32 %v2025, 34.0
        %v2035 = vmul.f32 %v2026, 34.0
        %v2036 = vsub.f32 %v1991, %v2027
        %v2037 = vsub.f32 %v1992, %v2028
        %v2038 = vsub.f32 %v1993, %v2029
        %v2039 = vsub.f32 %v1994, %v2030
        %v2040 = vsub.f32 %v1995, %v2031
        %v2041 = vsub.f32 %v1996, %v2032
        %v2042 = vsub.f32 %v1997, %v2033
        %v2043 = vsub.f32 %v1998, %v2034
        %v2044 = vsub.f32 %v1999, %v2035
        %vm2045 = vcmp.lt.f32.partialorder %v2018, 32.0
        %vm2046 = vcmp.lt.f32.partialorder %v2019, 32.0
        %vm2047 = vcmp.lt.f32.partialorder %v2020, 32.0
        %vm2048 = vcmp.lt.f32.partialorder %v2021, 32.0
        %vm2049 = vcmp.lt.f32.partialorder %v2022, 32.0
        %vm2050 = vcmp.lt.f32.partialorder %v2023, 32.0
        %vm2051 = vcmp.lt.f32.partialorder %v2024, 32.0
        %vm2052 = vcmp.lt.f32.partialorder %v2025, 32.0
        %vm2053 = vcmp.lt.f32.partialorder %v2026, 32.0
        %vm2054 = vcmp.lt.f32.partialorder %v2036, 32.0
        %vm2055 = vcmp.lt.f32.partialorder %v2037, 32.0
        %vm2056 = vcmp.lt.f32.partialorder %v2038, 32.0
        %vm2057 = vcmp.lt.f32.partialorder %v2039, 32.0
        %vm2058 = vcmp.lt.f32.partialorder %v2040, 32.0
        %vm2059 = vcmp.lt.f32.partialorder %v2041, 32.0
        %vm2060 = vcmp.lt.f32.partialorder %v2042, 32.0
        %vm2061 = vcmp.lt.f32.partialorder %v2043, 32.0
        %vm2062 = vcmp.lt.f32.partialorder %v2044, 32.0
        %vm2063 = vmand %vm2045, %vm2054
        %vm2064 = vmand %vm2046, %vm2055
        %vm2065 = vmand %vm2047, %vm2056
        %vm2066 = vmand %vm2048, %vm2057
        %vm2067 = vmand %vm2049, %vm2058
        %vm2068 = vmand %vm2050, %vm2059
        %vm2069 = vmand %vm2051, %vm2060
        %vm2070 = vmand %vm2052, %vm2061
        %vm2071 = vmand %vm2053, %vm2062
        %v2072 = vsel %vm2063, 0.0009765625, 0.0
        %v2073 = vsel %vm2064, 0.0009765625, 0.0
        %v2074 = vsel %vm2065, 0.0009765625, 0.0
        %v2075 = vsel %vm2066, 0.0009765625, 0.0
        %v2076 = vsel %vm2067, 0.0009765625, 0.0
        %v2077 = vsel %vm2068, 0.0009765625, 0.0
        %v2078 = vsel %vm2069, 0.0009765625, 0.0
        %v2079 = vsel %vm2070, 0.0009765625, 0.0
        %v2080 = vsel %vm2071, 0.0009765625, 0.0
        %v2081 = vmul.f32 %v1972, %v2072
        %v2082 = vmul.f32 %v1973, %v2073
        %v2083 = vmul.f32 %v1974, %v2074
        %v2084 = vmul.f32 %v1975, %v2075
        %v2085 = vmul.f32 %v1976, %v2076
        %v2086 = vmul.f32 %v1977, %v2077
        %v2087 = vmul.f32 %v1978, %v2078
        %v2088 = vmul.f32 %v1979, %v2079
        %v2089 = vmul.f32 %v1980, %v2080
        %v2090 = vadd.f32 %v2081, %v2082
        %v2091 = vadd.f32 %v2090, %v2083
        %v2092 = vadd.f32 %v2091, %v2084
        %v2093 = vadd.f32 %v2092, %v2085
        %v2094 = vadd.f32 %v2093, %v2086
        %v2095 = vadd.f32 %v2094, %v2087
        %v2096 = vadd.f32 %v2095, %v2088
        %v2097 = vadd.f32 %v2096, %v2089
        %2098 = vadd.xlane.f32.xlu0 %v2097
        %v2099 = vpop.xlane.xlu0 %2098
        %v2100 = vmul.f32 %v2081, %v1972
        %v2101 = vmul.f32 %v2082, %v1973
        %v2102 = vmul.f32 %v2083, %v1974
        %v2103 = vmul.f32 %v2084, %v1975
        %v2104 = vmul.f32 %v2085, %v1976
        %v2105 = vmul.f32 %v2086, %v1977
        %v2106 = vmul.f32 %v2087, %v1978
        %v2107 = vmul.f32 %v2088, %v1979
        %v2108 = vmul.f32 %v2089, %v1980
        %v2109 = vadd.f32 %v2100, %v2101
        %v2110 = vadd.f32 %v2109, %v2102
        %v2111 = vadd.f32 %v2110, %v2103
        %v2112 = vadd.f32 %v2111, %v2104
        %v2113 = vadd.f32 %v2112, %v2105
        %v2114 = vadd.f32 %v2113, %v2106
        %v2115 = vadd.f32 %v2114, %v2107
        %v2116 = vadd.f32 %v2115, %v2108
        %2117 = vadd.xlane.f32.xlu0 %v2116
        %v2118 = vpop.xlane.xlu0 %2117
        %v2119 = vmul.f32 %v2099, %v2099
        %v2120 = vsub.f32 %v2118, %v2119
        %v2121 = vmax.f32 %v2120, 0.0
        %v2122 = vld [vmem:[%s2] sm:$0xff]
        %v2123 = vadd.f32 %v2121, 1e-05
        %v2124 = vrsqrt.pop %v2123
        %v2125 = vmul.f32 %v2122, %v2124
        %v2126 = vld [vmem:[%s3] sm:$0xff]
        %v2127 = vmul.f32 %v2099, %v2125
        %v2128 = vsub.f32 %v2126, %v2127
        %2130 = vset.pattern.permute.xlu0 0
        %2131 = vperm.xlu0 %2130, %v2125
        %v2132 = vpop.permute.xlu0 %2131
        %v2134 = vmul.f32 %v1972, %v2132
        %v2135 = vmul.f32 %v1973, %v2132
        %v2136 = vmul.f32 %v1974, %v2132
        %v2137 = vmul.f32 %v1975, %v2132
        %v2138 = vmul.f32 %v1976, %v2132
        %v2139 = vmul.f32 %v1977, %v2132
        %v2140 = vmul.f32 %v1978, %v2132
        %v2141 = vmul.f32 %v1979, %v2132
        %v2142 = vmul.f32 %v1980, %v2132
        %2144 = vset.pattern.permute.xlu0 0
        %2145 = vperm.xlu0 %2144, %v2128
        %v2146 = vpop.permute.xlu0 %2145
        %v2148 = vadd.f32 %v2134, %v2146
        %v2149 = vadd.f32 %v2135, %v2146
        %v2150 = vadd.f32 %v2136, %v2146
        %v2151 = vadd.f32 %v2137, %v2146
        %v2152 = vadd.f32 %v2138, %v2146
        %v2153 = vadd.f32 %v2139, %v2146
        %v2154 = vadd.f32 %v2140, %v2146
        %v2155 = vadd.f32 %v2141, %v2146
        %v2156 = vadd.f32 %v2142, %v2146
        %v2157 = vmax.f32 %v2148, 0.0
        %v2158 = vmax.f32 %v2149, 0.0
        %v2159 = vmax.f32 %v2150, 0.0
        %v2160 = vmax.f32 %v2151, 0.0
        %v2161 = vmax.f32 %v2152, 0.0
        %v2162 = vmax.f32 %v2153, 0.0
        %v2163 = vmax.f32 %v2154, 0.0
        %v2164 = vmax.f32 %v2155, 0.0
        %v2165 = vmax.f32 %v2156, 0.0
        %2166 = vst [vmem:[%s228] sm:$0xff] %v2157
        %2167 = vst [vmem:[%s228 + $0x8] sm:$0xff] %v2158
        %2168 = vst [vmem:[%s228 + $0x10] sm:$0xff] %v2159
        %2169 = vst [vmem:[%s228 + $0x18] sm:$0xff] %v2160
        %2170 = vst [vmem:[%s228 + $0x20] sm:$0xff] %v2161
        %2171 = vst [vmem:[%s228 + $0x28] sm:$0xff] %v2162
        %2172 = vst [vmem:[%s228 + $0x30] sm:$0xff] %v2163
        %2173 = vst [vmem:[%s228 + $0x38] sm:$0xff] %v2164
        %2174 = vst [vmem:[%s228 + $0x40] sm:$0xff] %v2165
        %s2175 = sand.u32 %s119, 1
        %s2176 = scalar_lea.sflag [#allocation5], %s2175
        %s2177 = sand.u32 %s119, 1
        %s2178 = smul.addr %s2177, 72
        %s2179 = scalar_lea.vmem [#allocation8], %s2178
        // Predicated region
        $region45: #{tpu_custom_call.1} parent=35 // pred_check
          %p2180 = pneg %p129
        $region46: #{tpu_custom_call.1} parent=35 // pred_check_branch
          %2182 = sbr.rel (%p2180) target = $region48
        $region47: #{tpu_custom_call.1} parent=35 // pred_region
          %s2184 = ssub.s32 1152, 1152
          %2185 = vsyncadd %s2176, %s2184
          %s2186 = smul.addr %s22, 9
          %s2187 = smul.addr %s2186, 128
          %s2188 = scalar_lea.hbm %s4, %s2187
          %s2190 = sshll.u32 %s2179, 4
          %s2191 = int_to_ptr.vmem [resolvable:$true] %s2190
          %2193 = dma.vmem_to_hbm [thread:$0]  %s2191, 1152, %s2188, %s2176
        $region48: #{tpu_custom_call.1} parent=35 // pred_fallthru
          _
      $region36: #{tpu_custom_call.1} parent=5 // pred_fallthru
        _
      %p2194 = scmp.le.s32.totalorder 2, %s17
      // Predicated region
      $region49: #{tpu_custom_call.1} parent=5 // pred_check
        %p2195 = pneg %p2194
      $region50: #{tpu_custom_call.1} parent=5 // pred_check_branch
        %2197 = sbr.rel (%p2195) target = $region52
      $region51: #{tpu_custom_call.1} parent=5 // pred_region
        %s2198 = ssub.s32 %s17, 2
        // Predicated region
        $region53: #{tpu_custom_call.1} parent=51 // pred_check
          %p2199 = pneg %p135
        $region54: #{tpu_custom_call.1} parent=51 // pred_check_branch
          %2201 = sbr.rel (%p2199) target = $region56
        $region55: #{tpu_custom_call.1} parent=51 // pred_region
          %s2202 = sand.u32 %s120, 1
          %s2203 = scalar_lea.sflag [#allocation5], %s2202
          %s2204 = sand.u32 %s120, 1
          %s2205 = smul.addr %s2204, 72
          %s2206 = scalar_lea.vmem [#allocation8], %s2205
          %2207 = dma.done %s2203, 1152
        $region56: #{tpu_custom_call.1} parent=51 // pred_fallthru
          _
      $region52: #{tpu_custom_call.1} parent=5 // pred_fallthru
        _
    $region6: #{tpu_custom_call.1} parent=1 // loop_footer
      %s21 = sadd.s32 1, %s17
    $region7: #{tpu_custom_call.1} parent=1 // loop_footer_branch
      %16 = sbr.rel target = $region3
    $region8: #{tpu_custom_call.1} parent=1 // loop_exit
      _
    %2208 = vsyncpa [#allocation4], 1
    %s2209 = scalar_lea.sflag [#allocation4], 1
    %2210 = vsyncpa %s2209, 1
    %2211 = vsyncpa [#allocation7], 1
    %2212 = vsyncpa [#allocation5], 1
    %s2213 = scalar_lea.sflag [#allocation5], 1
    %2214 = vsyncpa %s2213, 1

</llo_original>
